<compile_context>
chip_gen: v5e
topology: v5e:2x2
jax: 0.10.0
libtpu: 0.0.40
codegen_flags: <defaults>
</compile_context>

<pallas_src>
import functools

import numpy as np
import jax
import jax.numpy as jnp
from jax.experimental import pallas as pl
from jax.experimental.pallas import tpu as pltpu


# ----------------------------------------------------------------------------
# Pallas kernel: phase-folded (stride-1) conv1d as K' shifted MXU matmuls,
# fused bias + LeakyReLU.  One grid step = one discriminator (own weights).
# ----------------------------------------------------------------------------
def _conv_tap_kernel(x_ref, w_ref, b_ref, o_ref, *, n_taps, l_pad, slope):
    rb = x_ref.shape[1]
    cin = x_ref.shape[3]
    cout = w_ref.shape[3]

    # All (repeat*batch) rows and output time positions merged into one big
    # MXU M dimension.  l_pad is a multiple of 16, so the reshape is a
    # tile-aligned no-op relayout for bf16.
    acc = jnp.zeros((rb * l_pad, cout), jnp.float32)
    for k in range(n_taps):                               # static unroll
        xk = x_ref[0, :, pl.ds(k, l_pad), :]              # (rb, l_pad, cin)
        xk = xk.reshape(rb * l_pad, cin)
        acc = acc + jnp.dot(xk, w_ref[0, k],
                            preferred_element_type=jnp.float32)
    acc = acc + b_ref[0].astype(jnp.float32)              # (1, cout) broadcast
    if slope is not None:
        acc = jnp.where(acc >= 0.0, acc, acc * slope)
    o_ref[...] = acc.astype(o_ref.dtype).reshape(1, rb, l_pad, cout)


def _conv1d_batched(x, w, b, *, kernel_size, stride, pad, pad_mode, slope):
    """Conv1d (cross-correlation) in NLC layout via one Pallas kernel.

    x: (D, RB, L, C)       bf16   (D discriminators, RB = repeats*batch rows)
    w: (D, Kp, stride*C, Cout) bf16 phase-folded dense weight
    b: (D, 1, Cout)        f32
    returns (D, RB, L_out, Cout) bf16
    """
    d_sz, rb, length, c = x.shape
    n_taps, cin_f, cout = w.shape[1], w.shape[2], w.shape[3]
    assert cin_f == stride * c

    if pad > 0:
        mode = "reflect" if pad_mode == "reflect" else "constant"
        x = jnp.pad(x, ((0, 0), (0, 0), (pad, pad), (0, 0)), mode=mode)
    lp = length + 2 * pad
    l_out = (lp - kernel_size) // stride + 1

    # Pad the output length up to a multiple of 16 so the in-kernel row merge
    # is tile-aligned (single fast path); extra rows are sliced off after.
    l_pad = -(-l_out // 16) * 16

    # phase fold: stride-s conv -> stride-1 conv with s*C channels (pure
    # reshape; zero-padded weight taps / padded rows multiply don't-care
    # samples that never reach a kept output position).
    lf = l_pad + n_taps - 1
    need = lf * stride
    if need > lp:
        x = jnp.pad(x, ((0, 0), (0, 0), (0, need - lp), (0, 0)))
    elif need < lp:
        x = x[:, :, :need, :]
    xf = x.reshape(d_sz, rb, lf, cin_f)

    kernel = functools.partial(_conv_tap_kernel, n_taps=n_taps, l_pad=l_pad,
                               slope=slope)
    out = pl.pallas_call(
        kernel,
        out_shape=jax.ShapeDtypeStruct((d_sz, rb, l_pad, cout), jnp.bfloat16),
        grid=(d_sz,),
        in_specs=[
            pl.BlockSpec((1, rb, lf, cin_f), lambda i: (i, 0, 0, 0)),
            pl.BlockSpec((1, n_taps, cin_f, cout), lambda i: (i, 0, 0, 0)),
            pl.BlockSpec((1, 1, cout), lambda i: (i, 0, 0)),
        ],
        out_specs=pl.BlockSpec((1, rb, l_pad, cout), lambda i: (i, 0, 0, 0)),
        compiler_params=pltpu.CompilerParams(
            dimension_semantics=("parallel",)),
    )(xf, w, b)
    if l_pad != l_out:
        out = out[:, :, :l_out, :]
    return out


# ----------------------------------------------------------------------------
# Weight preparation (host side, once at init)
# ----------------------------------------------------------------------------
def _dense_from_grouped(wt, cin, groups):
    """torch-layout grouped weight (Cout, Cin/groups, K) -> dense (K, Cin, Cout)."""
    cout, icg, k_sz = wt.shape
    ocg = cout // groups
    dense = np.zeros((k_sz, cin, cout), np.float32)
    for g in range(groups):
        blk = wt[g * ocg:(g + 1) * ocg]                      # (ocg, icg, K)
        dense[:, g * icg:(g + 1) * icg,
              g * ocg:(g + 1) * ocg] = np.transpose(blk, (2, 1, 0))
    return dense


def _fold_weight(dense_kcio, stride):
    """(K, Cin, Cout) -> (ceil(K/s), s*Cin, Cout), matching the x phase fold."""
    k_sz, cin, cout = dense_kcio.shape
    kp = -(-k_sz // stride)
    w = np.zeros((kp * stride, cin, cout), np.float32)
    w[:k_sz] = dense_kcio
    return w.reshape(kp, stride, cin, cout).reshape(kp, stride * cin, cout)


def _design_prototype_filter(taps=62, cutoff_ratio=0.142, beta=9.0):
    assert taps % 2 == 0
    omega_c = np.pi * cutoff_ratio
    with np.errstate(invalid="ignore"):
        h_i = np.sin(omega_c * (np.arange(taps + 1) - 0.5 * taps)) / (
            np.pi * (np.arange(taps + 1) - 0.5 * taps))
    h_i[taps // 2] = np.cos(0) * cutoff_ratio
    w = np.kaiser(taps + 1, beta)
    return h_i * w


def _pqmf_analysis_filter(subbands, taps, cutoff_ratio, beta):
    h_proto = _design_prototype_filter(taps, cutoff_ratio, beta)
    h_analysis = np.zeros((subbands, taps + 1))
    for k in range(subbands):
        h_analysis[k] = (2.0 * h_proto * np.cos(
            (2 * k + 1) * (np.pi / (2 * subbands))
            * (np.arange(taps + 1) - taps / 2)
            + (-1) ** k * np.pi / 4))
    return h_analysis.astype(np.float32)


def _layer_configs(in_channels, dp):
    neg = dp["nonlinear_activation_params"]["negative_slope"]
    ks = dp["kernel_sizes"]
    assert len(ks) == 2 and ks[0] % 2 == 1 and ks[1] % 2 == 1
    channels, maxc = dp["channels"], dp["max_downsample_channels"]
    cfgs = []
    k1 = int(np.prod(ks))
    cfgs.append(dict(K=k1, stride=1, pad=(k1 - 1) // 2, pad_mode="reflect",
                     cin=in_channels, cout=channels, groups=1, slope=neg))
    in_chs = channels
    for ds in dp["downsample_scales"]:
        out_chs = min(in_chs * ds, maxc)
        cfgs.append(dict(K=ds * 10 + 1, stride=ds, pad=ds * 5, pad_mode="zero",
                         cin=in_chs, cout=out_chs, groups=in_chs // 4,
                         slope=neg))
        in_chs = out_chs
    out_chs = min(in_chs * 2, maxc)
    cfgs.append(dict(K=ks[0], stride=1, pad=(ks[0] - 1) // 2, pad_mode="zero",
                     cin=in_chs, cout=out_chs, groups=1, slope=neg))
    cfgs.append(dict(K=ks[1], stride=1, pad=(ks[1] - 1) // 2, pad_mode="zero",
                     cin=out_chs, cout=dp["out_channels"], groups=1,
                     slope=None))
    return cfgs


# ----------------------------------------------------------------------------
# StyleMelGANDiscriminator (forward-pass-equivalent, Pallas-backed)
# ----------------------------------------------------------------------------
class StyleMelGANDiscriminatorPallas:
    def __init__(self, key, repeats=2,
                 window_sizes=(512, 1024, 2048, 4096),
                 pqmf_params=((1, None, None, None), (2, 62, 0.267, 9.0),
                              (4, 62, 0.142, 9.0), (8, 62, 0.07949, 9.0)),
                 discriminator_params=None, use_weight_norm=True, seed=0):
        assert len(window_sizes) == len(pqmf_params)
        sizes = [ws // p[0] for ws, p in zip(window_sizes, pqmf_params)]
        assert len(window_sizes) == sum(sizes[0] == s for s in sizes)
        self.repeats = int(repeats)
        self.window_sizes = list(window_sizes)
        self.subbands = [int(p[0]) for p in pqmf_params]
        self.pqmf_taps = [None if p[1] is None else int(p[1])
                          for p in pqmf_params]
        dp = discriminator_params
        self.cfgs = _layer_configs(8, dp)   # layer-1 C_in padded to 8
        self.params = self._build_params(key, dp, pqmf_params)
        # use_weight_norm: reparameterization only -> forward already uses the
        # effective weights; nothing to apply here.
        del use_weight_norm
        self._np_rng = np.random.RandomState(seed)
        self._fwd = jax.jit(self._make_forward())

    # -- parameters --------------------------------------------------------
    def _build_params(self, key, dp, pqmf_params):
        d_cnt = len(self.subbands)
        layers = []
        for li, cfg in enumerate(self.cfgs):
            w_stack, b_stack = [], []
            for d in range(d_cnt):
                cin_d = self.subbands[d] if li == 0 else cfg["cin"]
                groups = cfg["groups"]
                icg = cin_d // groups
                key, kw, kb = jax.random.split(key, 3)
                wt = 0.02 * np.asarray(
                    jax.random.normal(kw, (cfg["cout"], icg, cfg["K"]),
                                      jnp.float32))
                dense = _dense_from_grouped(wt, cin_d, groups)
                if li == 0 and cin_d < 8:
                    dense = np.pad(dense, ((0, 0), (0, 8 - cin_d), (0, 0)))
                w_stack.append(_fold_weight(dense, cfg["stride"]))
                if dp["bias"]:
                    b = 0.01 * np.asarray(
                        jax.random.normal(kb, (cfg["cout"],), jnp.float32))
                else:
                    b = np.zeros((cfg["cout"],), np.float32)
                b_stack.append(b)
            layers.append(dict(
                w=jnp.asarray(np.stack(w_stack), jnp.bfloat16),
                b=jnp.asarray(np.stack(b_stack)[:, None, :], jnp.float32)))
        pqmfs = [None]
        for (sb, taps, cutoff, beta) in pqmf_params[1:]:
            h = _pqmf_analysis_filter(int(sb), int(taps), cutoff, beta)
            dense = np.transpose(h)[:, None, :].astype(np.float32)
            pqmfs.append(dict(
                w=jnp.asarray(_fold_weight(dense, int(sb))[None], jnp.bfloat16),
                b=jnp.zeros((1, 1, int(sb)), jnp.float32)))
        return dict(layers=layers, pqmf=pqmfs)

    # -- forward -----------------------------------------------------------
    def _make_forward(self):
        window_sizes = tuple(self.window_sizes)
        subbands = tuple(self.subbands)
        taps = tuple(self.pqmf_taps)
        cfgs = [dict(c) for c in self.cfgs]
        repeats = self.repeats
        d_cnt = len(window_sizes)

        def forward(params, x, starts):
            bsz = x.shape[0]
            rb = repeats * bsz
            # 1) random-window crops + per-discriminator PQMF analysis,
            #    batching the `repeats` crops into one set of rows.
            ys = []
            for d in range(d_cnt):
                ws = window_sizes[d]
                crops = [jax.lax.dynamic_slice_in_dim(x, starts[r, d], ws,
                                                      axis=2)
                         for r in range(repeats)]            # (B, 1, ws) each
                xc = jnp.concatenate(crops, axis=0)          # (rb, 1, ws)
                xc = xc.reshape(1, rb, ws, 1).astype(jnp.bfloat16)
                if subbands[d] == 1:
                    ys.append(xc)                            # Identity PQMF
                else:
                    pq = params["pqmf"][d]
                    ys.append(_conv1d_batched(
                        xc, pq["w"], pq["b"],
                        kernel_size=taps[d] + 1, stride=subbands[d],
                        pad=taps[d] // 2, pad_mode="zero", slope=None))
            # 2) pad channels to 8 and stack the 4 discriminators on the grid
            #    axis (they share L = ws // subbands after the PQMF).
            h = jnp.concatenate(
                [jnp.pad(y, ((0, 0), (0, 0), (0, 0), (0, 8 - y.shape[-1])))
                 for y in ys], axis=0)                       # (D, rb, L, 8)
            # 3) shared-shape layer chain: one pallas_call per layer for ALL
            #    repeats x discriminators x batch.
            feats = []
            for cfg, lp in zip(cfgs, params["layers"]):
                h = _conv1d_batched(h, lp["w"], lp["b"],
                                    kernel_size=cfg["K"], stride=cfg["stride"],
                                    pad=cfg["pad"], pad_mode=cfg["pad_mode"],
                                    slope=cfg["slope"])
                feats.append(h)                              # (D, rb, L', C')
            # 4) unbatch into the reference repeats-major list of per-layer
            #    (B, C, T) float32 feature maps.
            feats_t = [jnp.transpose(f, (0, 1, 3, 2)).astype(jnp.float32)
                       for f in feats]
            outs = []
            for r in range(repeats):
                for d in range(d_cnt):
                    outs.append([f[d, r * bsz:(r + 1) * bsz] for f in feats_t])
            return outs

        return forward

    def __call__(self, x):
        t_len = int(x.shape[-1])
        starts = np.asarray(
            [[self._np_rng.randint(t_len - ws) for ws in self.window_sizes]
             for _ in range(self.repeats)], np.int32)
        return self._fwd(self.params, x, jnp.asarray(starts))


# ----------------------------------------------------------------------------
# Small numerical self-check of the phase-folded Pallas conv (both the
# natively-aligned and padded-output paths) against a plain-numpy reference.
# ----------------------------------------------------------------------------
def _self_test_folded_conv():
    rng = np.random.RandomState(1234)
    rb, cin, cout, k_sz, stride, groups, pad = 4, 16, 64, 41, 4, 4, 20
    for length in (64, 24):   # 64 -> l_out=16 (aligned), 24 -> l_out=6 (padded)
        x = rng.randn(rb, length, cin).astype(np.float32)
        wt = (0.02 * rng.randn(cout, cin // groups, k_sz)).astype(np.float32)
        b = (0.01 * rng.randn(cout)).astype(np.float32)
        dense = _dense_from_grouped(wt, cin, groups)

        x_bf = jnp.asarray(x, jnp.bfloat16)
        out = _conv1d_batched(
            x_bf.reshape(1, rb, length, cin),
            jnp.asarray(_fold_weight(dense, stride)[None], jnp.bfloat16),
            jnp.asarray(b[None, None, :], jnp.float32),
            kernel_size=k_sz, stride=stride, pad=pad, pad_mode="zero",
            slope=0.2)
        out = np.asarray(out[0], np.float32)

        xr = np.asarray(x_bf, np.float32)
        wr = np.asarray(jnp.asarray(dense, jnp.bfloat16), np.float32)
        xp = np.pad(xr, ((0, 0), (pad, pad), (0, 0)))
        l_out = (length + 2 * pad - k_sz) // stride + 1
        ref = np.zeros((rb, l_out, cout), np.float32)
        for kk in range(k_sz):
            ref += np.einsum(
                "nlc,co->nlo",
                xp[:, kk:kk + (l_out - 1) * stride + 1:stride, :], wr[kk])
        ref += b
        ref = np.where(ref >= 0.0, ref, 0.2 * ref)
        assert out.shape == ref.shape
        np.testing.assert_allclose(out, ref, rtol=2e-2, atol=2e-2)


# ----------------------------------------------------------------------------
if __name__ == "__main__":
    key = jax.random.PRNGKey(0)
    key, xkey, wkey = jax.random.split(key, 3)

    _self_test_folded_conv()

    # Small-shape configuration consistent with the module (ws // subbands is
    # constant across discriminators, as the constructor asserts).
    window_sizes = [128, 256, 512, 1024]
    pqmf_params = [[1, None, None, None], [2, 62, 0.267, 9.0],
                   [4, 62, 0.142, 9.0], [8, 62, 0.07949, 9.0]]
    discriminator_params = {
        "out_channels": 1,
        "kernel_sizes": [5, 3],
        "channels": 16,
        "max_downsample_channels": 128,   # scaled down from 512 for small shapes
        "bias": True,
        "downsample_scales": [4, 4, 4, 1],
        "nonlinear_activation": "LeakyReLU",
        "nonlinear_activation_params": {"negative_slope": 0.2},
        "pad": "ReflectionPad1d",
        "pad_params": {},
    }

    B, T = 2, 1100   # T must exceed the largest random window
    x = jax.random.normal(xkey, (B, 1, T), jnp.float32)   # (B, 1, T) like torch

    model = StyleMelGANDiscriminatorPallas(
        wkey, repeats=2, window_sizes=window_sizes, pqmf_params=pqmf_params,
        discriminator_params=discriminator_params, seed=0)

    outs = model(x)
    jax.block_until_ready(jax.tree_util.tree_leaves(outs))

    # repeats * #discriminators items, each a list of per-layer feature maps
    assert len(outs) == 2 * len(window_sizes)
    assert all(len(o) == 7 for o in outs)
    assert outs[0][0].shape == (B, 16, 128)   # first conv: 16 ch, T=128
    assert outs[0][1].shape == (B, 64, 32)    # first downsample (stride 4)
    assert outs[0][-1].shape[1] == 1          # final conv out_channels == 1
    assert bool(jnp.all(jnp.isfinite(outs[0][-1])))
    print("KERNEL_OK")
</pallas_src>

<mosaic_0001>
module attributes {stable_mosaic.version = 11 : i64} {
  func.func @_conv_tap_kernel(%arg0: i32, %arg1: memref<1x4x26x64xbf16, #tpu.memory_space<vmem>>, %arg2: memref<1x11x64x64xbf16, #tpu.memory_space<vmem>>, %arg3: memref<1x1x64xf32, #tpu.memory_space<vmem>>, %arg4: memref<1x4x16x64xbf16, #tpu.memory_space<vmem>>) attributes {dimension_semantics = [#tpu.dimension_semantics<parallel>], iteration_bounds = array<i64: 1>, scalar_prefetch = 0 : i64, scratch_operands = 0 : i64, tpu.core_type = #tpu.core_type<tc>, window_params = [{transform_indices = @transform_0, window_bounds = array<i64: 1, 4, 26, 64>}, {transform_indices = @transform_1, window_bounds = array<i64: 1, 11, 64, 64>}, {transform_indices = @transform_2, window_bounds = array<i64: 1, 1, 64>}, {transform_indices = @transform_3, window_bounds = array<i64: 1, 4, 16, 64>}]} {
    %cst = arith.constant 0.000000e+00 : f32
    %0 = vector.broadcast %cst : f32 to vector<64x64xf32>
    %c0 = arith.constant 0 : index
    %c0_0 = arith.constant 0 : index
    %c0_1 = arith.constant 0 : index
    %c0_2 = arith.constant 0 : index
    %1 = vector.load %arg1[%c0, %c0_0, %c0_1, %c0_2] : memref<1x4x26x64xbf16, #tpu.memory_space<vmem>>, vector<1x4x16x64xbf16>
    %2 = vector.shape_cast %1 : vector<1x4x16x64xbf16> to vector<4x16x64xbf16>
    %3 = vector.shape_cast %2 : vector<4x16x64xbf16> to vector<64x64xbf16>
    %c0_3 = arith.constant 0 : index
    %c0_4 = arith.constant 0 : index
    %c0_5 = arith.constant 0 : index
    %c0_6 = arith.constant 0 : index
    %4 = vector.load %arg2[%c0_3, %c0_4, %c0_5, %c0_6] : memref<1x11x64x64xbf16, #tpu.memory_space<vmem>>, vector<1x1x64x64xbf16>
    %5 = vector.shape_cast %4 : vector<1x1x64x64xbf16> to vector<64x64xbf16>
    %cst_7 = arith.constant dense<0.000000e+00> : vector<64x64xf32>
    %6 = tpu.matmul %3, %5, %cst_7 {dimension_numbers = #tpu.dot_dimension_numbers<[1], [0], [0], [1], [0, 0, 1, 1], [], []>} : vector<64x64xbf16>, vector<64x64xbf16>, vector<64x64xf32> -> vector<64x64xf32>
    %7 = arith.addf %0, %6 : vector<64x64xf32>
    %c0_8 = arith.constant 0 : index
    %c0_9 = arith.constant 0 : index
    %c1 = arith.constant 1 : index
    %c0_10 = arith.constant 0 : index
    %8 = vector.load %arg1[%c0_8, %c0_9, %c1, %c0_10] : memref<1x4x26x64xbf16, #tpu.memory_space<vmem>>, vector<1x4x16x64xbf16>
    %9 = vector.shape_cast %8 : vector<1x4x16x64xbf16> to vector<4x16x64xbf16>
    %10 = vector.shape_cast %9 : vector<4x16x64xbf16> to vector<64x64xbf16>
    %c0_11 = arith.constant 0 : index
    %c1_12 = arith.constant 1 : index
    %c0_13 = arith.constant 0 : index
    %c0_14 = arith.constant 0 : index
    %11 = vector.load %arg2[%c0_11, %c1_12, %c0_13, %c0_14] : memref<1x11x64x64xbf16, #tpu.memory_space<vmem>>, vector<1x1x64x64xbf16>
    %12 = vector.shape_cast %11 : vector<1x1x64x64xbf16> to vector<64x64xbf16>
    %cst_15 = arith.constant dense<0.000000e+00> : vector<64x64xf32>
    %13 = tpu.matmul %10, %12, %cst_15 {dimension_numbers = #tpu.dot_dimension_numbers<[1], [0], [0], [1], [0, 0, 1, 1], [], []>} : vector<64x64xbf16>, vector<64x64xbf16>, vector<64x64xf32> -> vector<64x64xf32>
    %14 = arith.addf %7, %13 : vector<64x64xf32>
    %c0_16 = arith.constant 0 : index
    %c0_17 = arith.constant 0 : index
    %c2 = arith.constant 2 : index
    %c0_18 = arith.constant 0 : index
    %15 = vector.load %arg1[%c0_16, %c0_17, %c2, %c0_18] : memref<1x4x26x64xbf16, #tpu.memory_space<vmem>>, vector<1x4x16x64xbf16>
    %16 = vector.shape_cast %15 : vector<1x4x16x64xbf16> to vector<4x16x64xbf16>
    %17 = vector.shape_cast %16 : vector<4x16x64xbf16> to vector<64x64xbf16>
    %c0_19 = arith.constant 0 : index
    %c2_20 = arith.constant 2 : index
    %c0_21 = arith.constant 0 : index
    %c0_22 = arith.constant 0 : index
    %18 = vector.load %arg2[%c0_19, %c2_20, %c0_21, %c0_22] : memref<1x11x64x64xbf16, #tpu.memory_space<vmem>>, vector<1x1x64x64xbf16>
    %19 = vector.shape_cast %18 : vector<1x1x64x64xbf16> to vector<64x64xbf16>
    %cst_23 = arith.constant dense<0.000000e+00> : vector<64x64xf32>
    %20 = tpu.matmul %17, %19, %cst_23 {dimension_numbers = #tpu.dot_dimension_numbers<[1], [0], [0], [1], [0, 0, 1, 1], [], []>} : vector<64x64xbf16>, vector<64x64xbf16>, vector<64x64xf32> -> vector<64x64xf32>
    %21 = arith.addf %14, %20 : vector<64x64xf32>
    %c0_24 = arith.constant 0 : index
    %c0_25 = arith.constant 0 : index
    %c3 = arith.constant 3 : index
    %c0_26 = arith.constant 0 : index
    %22 = vector.load %arg1[%c0_24, %c0_25, %c3, %c0_26] : memref<1x4x26x64xbf16, #tpu.memory_space<vmem>>, vector<1x4x16x64xbf16>
    %23 = vector.shape_cast %22 : vector<1x4x16x64xbf16> to vector<4x16x64xbf16>
    %24 = vector.shape_cast %23 : vector<4x16x64xbf16> to vector<64x64xbf16>
    %c0_27 = arith.constant 0 : index
    %c3_28 = arith.constant 3 : index
    %c0_29 = arith.constant 0 : index
    %c0_30 = arith.constant 0 : index
    %25 = vector.load %arg2[%c0_27, %c3_28, %c0_29, %c0_30] : memref<1x11x64x64xbf16, #tpu.memory_space<vmem>>, vector<1x1x64x64xbf16>
    %26 = vector.shape_cast %25 : vector<1x1x64x64xbf16> to vector<64x64xbf16>
    %cst_31 = arith.constant dense<0.000000e+00> : vector<64x64xf32>
    %27 = tpu.matmul %24, %26, %cst_31 {dimension_numbers = #tpu.dot_dimension_numbers<[1], [0], [0], [1], [0, 0, 1, 1], [], []>} : vector<64x64xbf16>, vector<64x64xbf16>, vector<64x64xf32> -> vector<64x64xf32>
    %28 = arith.addf %21, %27 : vector<64x64xf32>
    %c0_32 = arith.constant 0 : index
    %c0_33 = arith.constant 0 : index
    %c4 = arith.constant 4 : index
    %c0_34 = arith.constant 0 : index
    %29 = vector.load %arg1[%c0_32, %c0_33, %c4, %c0_34] : memref<1x4x26x64xbf16, #tpu.memory_space<vmem>>, vector<1x4x16x64xbf16>
    %30 = vector.shape_cast %29 : vector<1x4x16x64xbf16> to vector<4x16x64xbf16>
    %31 = vector.shape_cast %30 : vector<4x16x64xbf16> to vector<64x64xbf16>
    %c0_35 = arith.constant 0 : index
    %c4_36 = arith.constant 4 : index
    %c0_37 = arith.constant 0 : index
    %c0_38 = arith.constant 0 : index
    %32 = vector.load %arg2[%c0_35, %c4_36, %c0_37, %c0_38] : memref<1x11x64x64xbf16, #tpu.memory_space<vmem>>, vector<1x1x64x64xbf16>
    %33 = vector.shape_cast %32 : vector<1x1x64x64xbf16> to vector<64x64xbf16>
    %cst_39 = arith.constant dense<0.000000e+00> : vector<64x64xf32>
    %34 = tpu.matmul %31, %33, %cst_39 {dimension_numbers = #tpu.dot_dimension_numbers<[1], [0], [0], [1], [0, 0, 1, 1], [], []>} : vector<64x64xbf16>, vector<64x64xbf16>, vector<64x64xf32> -> vector<64x64xf32>
    %35 = arith.addf %28, %34 : vector<64x64xf32>
    %c0_40 = arith.constant 0 : index
    %c0_41 = arith.constant 0 : index
    %c5 = arith.constant 5 : index
    %c0_42 = arith.constant 0 : index
    %36 = vector.load %arg1[%c0_40, %c0_41, %c5, %c0_42] : memref<1x4x26x64xbf16, #tpu.memory_space<vmem>>, vector<1x4x16x64xbf16>
    %37 = vector.shape_cast %36 : vector<1x4x16x64xbf16> to vector<4x16x64xbf16>
    %38 = vector.shape_cast %37 : vector<4x16x64xbf16> to vector<64x64xbf16>
    %c0_43 = arith.constant 0 : index
    %c5_44 = arith.constant 5 : index
    %c0_45 = arith.constant 0 : index
    %c0_46 = arith.constant 0 : index
    %39 = vector.load %arg2[%c0_43, %c5_44, %c0_45, %c0_46] : memref<1x11x64x64xbf16, #tpu.memory_space<vmem>>, vector<1x1x64x64xbf16>
    %40 = vector.shape_cast %39 : vector<1x1x64x64xbf16> to vector<64x64xbf16>
    %cst_47 = arith.constant dense<0.000000e+00> : vector<64x64xf32>
    %41 = tpu.matmul %38, %40, %cst_47 {dimension_numbers = #tpu.dot_dimension_numbers<[1], [0], [0], [1], [0, 0, 1, 1], [], []>} : vector<64x64xbf16>, vector<64x64xbf16>, vector<64x64xf32> -> vector<64x64xf32>
    %42 = arith.addf %35, %41 : vector<64x64xf32>
    %c0_48 = arith.constant 0 : index
    %c0_49 = arith.constant 0 : index
    %c6 = arith.constant 6 : index
    %c0_50 = arith.constant 0 : index
    %43 = vector.load %arg1[%c0_48, %c0_49, %c6, %c0_50] : memref<1x4x26x64xbf16, #tpu.memory_space<vmem>>, vector<1x4x16x64xbf16>
    %44 = vector.shape_cast %43 : vector<1x4x16x64xbf16> to vector<4x16x64xbf16>
    %45 = vector.shape_cast %44 : vector<4x16x64xbf16> to vector<64x64xbf16>
    %c0_51 = arith.constant 0 : index
    %c6_52 = arith.constant 6 : index
    %c0_53 = arith.constant 0 : index
    %c0_54 = arith.constant 0 : index
    %46 = vector.load %arg2[%c0_51, %c6_52, %c0_53, %c0_54] : memref<1x11x64x64xbf16, #tpu.memory_space<vmem>>, vector<1x1x64x64xbf16>
    %47 = vector.shape_cast %46 : vector<1x1x64x64xbf16> to vector<64x64xbf16>
    %cst_55 = arith.constant dense<0.000000e+00> : vector<64x64xf32>
    %48 = tpu.matmul %45, %47, %cst_55 {dimension_numbers = #tpu.dot_dimension_numbers<[1], [0], [0], [1], [0, 0, 1, 1], [], []>} : vector<64x64xbf16>, vector<64x64xbf16>, vector<64x64xf32> -> vector<64x64xf32>
    %49 = arith.addf %42, %48 : vector<64x64xf32>
    %c0_56 = arith.constant 0 : index
    %c0_57 = arith.constant 0 : index
    %c7 = arith.constant 7 : index
    %c0_58 = arith.constant 0 : index
    %50 = vector.load %arg1[%c0_56, %c0_57, %c7, %c0_58] : memref<1x4x26x64xbf16, #tpu.memory_space<vmem>>, vector<1x4x16x64xbf16>
    %51 = vector.shape_cast %50 : vector<1x4x16x64xbf16> to vector<4x16x64xbf16>
    %52 = vector.shape_cast %51 : vector<4x16x64xbf16> to vector<64x64xbf16>
    %c0_59 = arith.constant 0 : index
    %c7_60 = arith.constant 7 : index
    %c0_61 = arith.constant 0 : index
    %c0_62 = arith.constant 0 : index
    %53 = vector.load %arg2[%c0_59, %c7_60, %c0_61, %c0_62] : memref<1x11x64x64xbf16, #tpu.memory_space<vmem>>, vector<1x1x64x64xbf16>
    %54 = vector.shape_cast %53 : vector<1x1x64x64xbf16> to vector<64x64xbf16>
    %cst_63 = arith.constant dense<0.000000e+00> : vector<64x64xf32>
    %55 = tpu.matmul %52, %54, %cst_63 {dimension_numbers = #tpu.dot_dimension_numbers<[1], [0], [0], [1], [0, 0, 1, 1], [], []>} : vector<64x64xbf16>, vector<64x64xbf16>, vector<64x64xf32> -> vector<64x64xf32>
    %56 = arith.addf %49, %55 : vector<64x64xf32>
    %c0_64 = arith.constant 0 : index
    %c0_65 = arith.constant 0 : index
    %c8 = arith.constant 8 : index
    %c0_66 = arith.constant 0 : index
    %57 = vector.load %arg1[%c0_64, %c0_65, %c8, %c0_66] : memref<1x4x26x64xbf16, #tpu.memory_space<vmem>>, vector<1x4x16x64xbf16>
    %58 = vector.shape_cast %57 : vector<1x4x16x64xbf16> to vector<4x16x64xbf16>
    %59 = vector.shape_cast %58 : vector<4x16x64xbf16> to vector<64x64xbf16>
    %c0_67 = arith.constant 0 : index
    %c8_68 = arith.constant 8 : index
    %c0_69 = arith.constant 0 : index
    %c0_70 = arith.constant 0 : index
    %60 = vector.load %arg2[%c0_67, %c8_68, %c0_69, %c0_70] : memref<1x11x64x64xbf16, #tpu.memory_space<vmem>>, vector<1x1x64x64xbf16>
    %61 = vector.shape_cast %60 : vector<1x1x64x64xbf16> to vector<64x64xbf16>
    %cst_71 = arith.constant dense<0.000000e+00> : vector<64x64xf32>
    %62 = tpu.matmul %59, %61, %cst_71 {dimension_numbers = #tpu.dot_dimension_numbers<[1], [0], [0], [1], [0, 0, 1, 1], [], []>} : vector<64x64xbf16>, vector<64x64xbf16>, vector<64x64xf32> -> vector<64x64xf32>
    %63 = arith.addf %56, %62 : vector<64x64xf32>
    %c0_72 = arith.constant 0 : index
    %c0_73 = arith.constant 0 : index
    %c9 = arith.constant 9 : index
    %c0_74 = arith.constant 0 : index
    %64 = vector.load %arg1[%c0_72, %c0_73, %c9, %c0_74] : memref<1x4x26x64xbf16, #tpu.memory_space<vmem>>, vector<1x4x16x64xbf16>
    %65 = vector.shape_cast %64 : vector<1x4x16x64xbf16> to vector<4x16x64xbf16>
    %66 = vector.shape_cast %65 : vector<4x16x64xbf16> to vector<64x64xbf16>
    %c0_75 = arith.constant 0 : index
    %c9_76 = arith.constant 9 : index
    %c0_77 = arith.constant 0 : index
    %c0_78 = arith.constant 0 : index
    %67 = vector.load %arg2[%c0_75, %c9_76, %c0_77, %c0_78] : memref<1x11x64x64xbf16, #tpu.memory_space<vmem>>, vector<1x1x64x64xbf16>
    %68 = vector.shape_cast %67 : vector<1x1x64x64xbf16> to vector<64x64xbf16>
    %cst_79 = arith.constant dense<0.000000e+00> : vector<64x64xf32>
    %69 = tpu.matmul %66, %68, %cst_79 {dimension_numbers = #tpu.dot_dimension_numbers<[1], [0], [0], [1], [0, 0, 1, 1], [], []>} : vector<64x64xbf16>, vector<64x64xbf16>, vector<64x64xf32> -> vector<64x64xf32>
    %70 = arith.addf %63, %69 : vector<64x64xf32>
    %c0_80 = arith.constant 0 : index
    %c0_81 = arith.constant 0 : index
    %c10 = arith.constant 10 : index
    %c0_82 = arith.constant 0 : index
    %71 = vector.load %arg1[%c0_80, %c0_81, %c10, %c0_82] : memref<1x4x26x64xbf16, #tpu.memory_space<vmem>>, vector<1x4x16x64xbf16>
    %72 = vector.shape_cast %71 : vector<1x4x16x64xbf16> to vector<4x16x64xbf16>
    %73 = vector.shape_cast %72 : vector<4x16x64xbf16> to vector<64x64xbf16>
    %c0_83 = arith.constant 0 : index
    %c10_84 = arith.constant 10 : index
    %c0_85 = arith.constant 0 : index
    %c0_86 = arith.constant 0 : index
    %74 = vector.load %arg2[%c0_83, %c10_84, %c0_85, %c0_86] : memref<1x11x64x64xbf16, #tpu.memory_space<vmem>>, vector<1x1x64x64xbf16>
    %75 = vector.shape_cast %74 : vector<1x1x64x64xbf16> to vector<64x64xbf16>
    %cst_87 = arith.constant dense<0.000000e+00> : vector<64x64xf32>
    %76 = tpu.matmul %73, %75, %cst_87 {dimension_numbers = #tpu.dot_dimension_numbers<[1], [0], [0], [1], [0, 0, 1, 1], [], []>} : vector<64x64xbf16>, vector<64x64xbf16>, vector<64x64xf32> -> vector<64x64xf32>
    %77 = arith.addf %70, %76 : vector<64x64xf32>
    %c0_88 = arith.constant 0 : index
    %c0_89 = arith.constant 0 : index
    %c0_90 = arith.constant 0 : index
    %78 = vector.load %arg3[%c0_88, %c0_89, %c0_90] : memref<1x1x64xf32, #tpu.memory_space<vmem>>, vector<1x1x64xf32>
    %79 = vector.shape_cast %78 : vector<1x1x64xf32> to vector<1x64xf32>
    %80 = vector.broadcast %79 : vector<1x64xf32> to vector<64x64xf32>
    %81 = arith.addf %77, %80 : vector<64x64xf32>
    %cst_91 = arith.constant 0.000000e+00 : f32
    %82 = vector.broadcast %cst_91 : f32 to vector<64x64xf32>
    %83 = arith.cmpf oge, %81, %82 : vector<64x64xf32>
    %cst_92 = arith.constant 2.000000e-01 : f32
    %84 = vector.broadcast %cst_92 : f32 to vector<64x64xf32>
    %85 = arith.mulf %81, %84 : vector<64x64xf32>
    %86 = arith.select %83, %81, %85 : vector<64x64xi1>, vector<64x64xf32>
    %87 = arith.truncf %86 : vector<64x64xf32> to vector<64x64xbf16>
    %88 = vector.shape_cast %87 : vector<64x64xbf16> to vector<1x4x16x64xbf16>
    %c0_93 = arith.constant 0 : index
    %c0_94 = arith.constant 0 : index
    %c0_95 = arith.constant 0 : index
    %c0_96 = arith.constant 0 : index
    %89 = vector.load %arg4[%c0_93, %c0_94, %c0_95, %c0_96] : memref<1x4x16x64xbf16, #tpu.memory_space<vmem>>, vector<1x4x16x64xbf16>
    tpu.vector_store %arg4[%c0_93, %c0_94, %c0_95, %c0_96], %88 {strides = array<i32>} : memref<1x4x16x64xbf16, #tpu.memory_space<vmem>>, vector<1x4x16x64xbf16>,
    return
  }
  func.func @transform_0(%arg0: i32) -> (i32, i32, i32, i32) {
    %c0_i32 = arith.constant 0 : i32
    %c0_i32_0 = arith.constant 0 : i32
    %c0_i32_1 = arith.constant 0 : i32
    %c0_i32_2 = arith.constant 0 : i32
    return %arg0, %c0_i32, %c0_i32_0, %c0_i32_1 : i32, i32, i32, i32
  }
  func.func @transform_1(%arg0: i32) -> (i32, i32, i32, i32) {
    %c0_i32 = arith.constant 0 : i32
    %c0_i32_0 = arith.constant 0 : i32
    %c0_i32_1 = arith.constant 0 : i32
    %c0_i32_2 = arith.constant 0 : i32
    return %arg0, %c0_i32, %c0_i32_0, %c0_i32_1 : i32, i32, i32, i32
  }
  func.func @transform_2(%arg0: i32) -> (i32, i32, i32) {
    %c0_i32 = arith.constant 0 : i32
    %c0_i32_0 = arith.constant 0 : i32
    %c0_i32_1 = arith.constant 0 : i32
    return %arg0, %c0_i32, %c0_i32_0 : i32, i32, i32
  }
  func.func @transform_3(%arg0: i32) -> (i32, i32, i32, i32) {
    %c0_i32 = arith.constant 0 : i32
    %c0_i32_0 = arith.constant 0 : i32
    %c0_i32_1 = arith.constant 0 : i32
    %c0_i32_2 = arith.constant 0 : i32
    return %arg0, %c0_i32, %c0_i32_0, %c0_i32_1 : i32, i32, i32, i32
  }
}

</mosaic_0001>

<llo_original>
// kernel: tpu_custom_call.1
$region0: #{tpu_custom_call.1}
  #allocation0 [shape = 'u32[]', space=smem, size = 0x4, offset = 0x4, fixed_abs, tag = 'smem constant byte address 0x4 - core index']
  #allocation1 [shape = 'u32[72,128]{1,0:T(1,128)}', space=vmem, size = 0x9000, scoped, tag = 'internal scratch']
  %s0 = inlined_call_operand.vmem [shape: bf16[1,4,26,64], index: 0, kind: input, shape index: {}]
  %s1 = inlined_call_operand.hbm [shape: bf16[1,11,64,64], index: 1, kind: input, shape index: {}]
  %s2 = inlined_call_operand.vmem [shape: f32[1,1,64], index: 2, kind: input, shape index: {}]
  %s3 = inlined_call_operand.hbm [shape: bf16[1,4,16,64], index: 3, kind: output, shape index: {}]
  %s4 = sld [smem:[#allocation0]]
  $region26: #{tpu_custom_call.1} parent=0
    _
  %s6 = ssub.s32 1, %s4
  %s7 = scalar_select 0, %s6, %s4
  $region1: #{tpu_custom_call.1} parent=0
    #allocation2 [shape = 'u8[180224]{0}', space=vmem, size = 0x2c000, scoped, tag = 'input window, operand 1, single buffered']
    #allocation3 [shape = 's32[1]{0}', space=sflag, size = 0x4, scoped, tag = 'scoped memory for tpu_custom_call.1']
    #allocation4 [shape = 's32[1]{0}', space=sflag, size = 0x4, scoped, tag = 'scoped memory for tpu_custom_call.1']
    #allocation5 [shape = 'u8[16384]{0}', space=vmem, size = 0x4000, scoped, tag = 'output window, operand 0, single buffered']
    %8 = vsyncpa [#allocation3], 0
    %9 = vsyncpa [#allocation4], 0
    // Predicated region
    $region2: #{tpu_custom_call.1} parent=1 // pred_check
      _
    $region3: #{tpu_custom_call.1} parent=1 // pred_check_branch
      %11 = sbr.rel (0) target = $region5
    $region4: #{tpu_custom_call.1} parent=1 // pred_region
      _
    $region5: #{tpu_custom_call.1} parent=1 // pred_fallthru
      _
    // Predicated region
    $region6: #{tpu_custom_call.1} parent=1 // pred_check
      _
    $region7: #{tpu_custom_call.1} parent=1 // pred_check_branch
      %13 = sbr.rel (0) target = $region9
    $region8: #{tpu_custom_call.1} parent=1 // pred_region
      %15 = vsyncadd [#allocation3], 0
      %s16 = sshll.u32 %s1, 4
      %s17 = int_to_ptr.hbm [resolvable:$true] %s16
      %s18 = sshll.u32 [#allocation2], 4
      %s19 = int_to_ptr.vmem [resolvable:$true] %s18
      %24 = dma.hbm_to_vmem [thread:$0]  %s17, 5632, %s19, [#allocation3], 64, 64, 4
    $region9: #{tpu_custom_call.1} parent=1 // pred_fallthru
      _
    // Predicated region
    $region10: #{tpu_custom_call.1} parent=1 // pred_check
      _
    $region11: #{tpu_custom_call.1} parent=1 // pred_check_branch
      %26 = sbr.rel (0) target = $region13
    $region12: #{tpu_custom_call.1} parent=1 // pred_region
      _
    $region13: #{tpu_custom_call.1} parent=1 // pred_fallthru
      _
    // Predicated region
    $region14: #{tpu_custom_call.1} parent=1 // pred_check
      _
    $region15: #{tpu_custom_call.1} parent=1 // pred_check_branch
      %28 = sbr.rel (0) target = $region17
    $region16: #{tpu_custom_call.1} parent=1 // pred_region
      %30 = dma.done [#allocation3], 5632
    $region17: #{tpu_custom_call.1} parent=1 // pred_fallthru
      _
    %v32 = vld [vmem:[%s0] sm:$0xf]
    %v33 = vld [vmem:[%s0 + $0x4] sm:$0xf]
    %v34 = vld [vmem:[%s0 + $0x10] sm:$0xf]
    %v35 = vld [vmem:[%s0 + $0x14] sm:$0xf]
    %v36 = vld [vmem:[%s0 + $0x20] sm:$0xf]
    %v37 = vld [vmem:[%s0 + $0x24] sm:$0xf]
    %v38 = vld [vmem:[%s0 + $0x30] sm:$0xf]
    %v39 = vld [vmem:[%s0 + $0x34] sm:$0xf]
    %v40 = vld [vmem:[#allocation2] sm:$0xf]
    %v41 = vld [vmem:[#allocation2 + $0x4] sm:$0xf]
    %v42 = vld [vmem:[#allocation2 + $0x8] sm:$0xf]
    %v43 = vld [vmem:[#allocation2 + $0xc] sm:$0xf]
    %v44 = vld [vmem:[#allocation2 + $0x10] sm:$0xf]
    %v45 = vld [vmem:[#allocation2 + $0x14] sm:$0xf]
    %v46 = vld [vmem:[#allocation2 + $0x18] sm:$0xf]
    %v47 = vld [vmem:[#allocation2 + $0x1c] sm:$0xf]
    %v48 = vld [vmem:[%s0 + $0x8] sm:$0x1]
    %v49 = vld [vmem:[%s0 + $0x18] sm:$0x1]
    %v50 = vld [vmem:[%s0 + $0x28] sm:$0x1]
    %v51 = vld [vmem:[%s0 + $0x38] sm:$0x1]
    %vm52 = vsmask.f32 3328
    %vm53 = vsmask.f32 7440
    %vm54 = vmor %vm52, %vm53
    %v56 = vshrl.u32 %v32, 16
    %v58 = vrot.slane %v56, 4
    %v59 = vshll.u32 %v32, 16
    %v61 = vrot.slane %v59, 5
    %v62 = vor.u32 %v58, %v61
    %v63 = vrot.slane %v62, 4
    %v65 = vshll.u32 %v33, 16
    %v67 = vrot.slane %v65, 5
    %v68 = vsel %vm54, %v63, %v67
    %v69 = vshrl.u32 %v33, 16
    %v71 = vrot.slane %v69, 4
    %v72 = vor.u32 %v71, %v67
    %v73 = vrot.slane %v72, 4
    %v75 = vshll.u32 %v48, 16
    %v77 = vrot.slane %v75, 5
    %v78 = vsel %vm54, %v73, %v77
    %v80 = vshrl.u32 %v34, 16
    %v82 = vrot.slane %v80, 4
    %v83 = vshll.u32 %v34, 16
    %v85 = vrot.slane %v83, 5
    %v86 = vor.u32 %v82, %v85
    %v87 = vrot.slane %v86, 4
    %v89 = vshll.u32 %v35, 16
    %v91 = vrot.slane %v89, 5
    %v92 = vsel %vm54, %v87, %v91
    %v93 = vshrl.u32 %v35, 16
    %v95 = vrot.slane %v93, 4
    %v96 = vor.u32 %v95, %v91
    %v97 = vrot.slane %v96, 4
    %v99 = vshll.u32 %v49, 16
    %v101 = vrot.slane %v99, 5
    %v102 = vsel %vm54, %v97, %v101
    %v104 = vshrl.u32 %v36, 16
    %v106 = vrot.slane %v104, 4
    %v107 = vshll.u32 %v36, 16
    %v109 = vrot.slane %v107, 5
    %v110 = vor.u32 %v106, %v109
    %v111 = vrot.slane %v110, 4
    %v113 = vshll.u32 %v37, 16
    %v115 = vrot.slane %v113, 5
    %v116 = vsel %vm54, %v111, %v115
    %v117 = vshrl.u32 %v37, 16
    %v119 = vrot.slane %v117, 4
    %v120 = vor.u32 %v119, %v115
    %v121 = vrot.slane %v120, 4
    %v123 = vshll.u32 %v50, 16
    %v125 = vrot.slane %v123, 5
    %v126 = vsel %vm54, %v121, %v125
    %v128 = vshrl.u32 %v38, 16
    %v130 = vrot.slane %v128, 4
    %v131 = vshll.u32 %v38, 16
    %v133 = vrot.slane %v131, 5
    %v134 = vor.u32 %v130, %v133
    %v135 = vrot.slane %v134, 4
    %v137 = vshll.u32 %v39, 16
    %v139 = vrot.slane %v137, 5
    %v140 = vsel %vm54, %v135, %v139
    %v141 = vshrl.u32 %v39, 16
    %v143 = vrot.slane %v141, 4
    %v144 = vor.u32 %v143, %v139
    %v145 = vrot.slane %v144, 4
    %v147 = vshll.u32 %v51, 16
    %v149 = vrot.slane %v147, 5
    %v150 = vsel %vm54, %v145, %v149
    %s151 = scalar_lea.vmem [#allocation2], 32
    %v152 = vld [vmem:[%s151] sm:$0xf]
    %v153 = vld [vmem:[%s151 + $0x4] sm:$0xf]
    %v154 = vld [vmem:[%s151 + $0x8] sm:$0xf]
    %v155 = vld [vmem:[%s151 + $0xc] sm:$0xf]
    %v156 = vld [vmem:[%s151 + $0x10] sm:$0xf]
    %v157 = vld [vmem:[%s151 + $0x14] sm:$0xf]
    %v158 = vld [vmem:[%s151 + $0x18] sm:$0xf]
    %v159 = vld [vmem:[%s151 + $0x1c] sm:$0xf]
    %v160 = vunpack.c.l.b16 %v68
    %v161 = vunpack.c.l.b16 %v78
    %v162 = vunpack.c.l.b16 %v92
    %v163 = vunpack.c.l.b16 %v102
    %v164 = vunpack.c.l.b16 %v116
    %v165 = vunpack.c.l.b16 %v126
    %v166 = vunpack.c.l.b16 %v140
    %v167 = vunpack.c.l.b16 %v150
    %v168 = vpack.c.b16 %v161, %v160
    %v169 = vpack.c.b16 %v163, %v162
    %v170 = vpack.c.b16 %v165, %v164
    %v171 = vpack.c.b16 %v167, %v166
    %v180 = vunpack.c.l.b16 %v152
    %v181 = vunpack.c.l.b16 %v153
    %v182 = vunpack.c.l.b16 %v154
    %v183 = vunpack.c.l.b16 %v155
    %v184 = vunpack.c.l.b16 %v156
    %v185 = vunpack.c.l.b16 %v157
    %v186 = vunpack.c.l.b16 %v158
    %v187 = vunpack.c.l.b16 %v159
    %v188 = vpack.c.b16 %v181, %v180
    %v189 = vpack.c.b16 %v183, %v182
    %v190 = vpack.c.b16 %v185, %v184
    %v191 = vpack.c.b16 %v187, %v186
    %vm196 = vcmask 523264
    %v198 = vsel %vm196, %v168, 0
    %v201 = vsel %vm196, %v169, 0
    %v204 = vsel %vm196, %v170, 0
    %v207 = vsel %vm196, %v171, 0
    %209 = vmatpush.bf16.msra.mxu0 0
    %210 = vmatpush.bf16.msra.mxu0 0
    %211 = vmatpush.bf16.msra.mxu0 0
    %212 = vmatpush.bf16.msra.mxu0 0
    %213 = vmatpush.bf16.msra.mxu0 %v191
    %214 = vmatpush.bf16.msra.mxu0 %v190
    %215 = vmatpush.bf16.msra.mxu0 %v189
    %216 = vmatpush.bf16.msra.mxu0 %v188
    %217 = vmatmul.bf16.gmra.mxu0 %v198
    %v218 = vpop.f32.mrf.mxu0
    %v219 = vadd.f32 0.0, %v218
    %v220 = vpop.f32.mrf.mxu0
    %v221 = vadd.f32 0.0, %v220
    %222 = vmatmul.bf16.gmra.mxu0 %v201
    %v223 = vpop.f32.mrf.mxu0
    %v224 = vadd.f32 0.0, %v223
    %v225 = vpop.f32.mrf.mxu0
    %v226 = vadd.f32 0.0, %v225
    %227 = vmatmul.bf16.gmra.mxu0 %v204
    %v228 = vpop.f32.mrf.mxu0
    %v229 = vadd.f32 0.0, %v228
    %v230 = vpop.f32.mrf.mxu0
    %v231 = vadd.f32 0.0, %v230
    %232 = vmatmul.bf16.gmra.mxu0 %v207
    %v233 = vpop.f32.mrf.mxu0
    %v234 = vadd.f32 0.0, %v233
    %v235 = vpop.f32.mrf.mxu0
    %v236 = vadd.f32 0.0, %v235
    %237 = vdwg.mxu0
    %v246 = vunpack.c.l.b16 %v32
    %v247 = vunpack.c.l.b16 %v33
    %v248 = vunpack.c.l.b16 %v34
    %v249 = vunpack.c.l.b16 %v35
    %v250 = vunpack.c.l.b16 %v36
    %v251 = vunpack.c.l.b16 %v37
    %v252 = vunpack.c.l.b16 %v38
    %v253 = vunpack.c.l.b16 %v39
    %v254 = vpack.c.b16 %v247, %v246
    %v255 = vpack.c.b16 %v249, %v248
    %v256 = vpack.c.b16 %v251, %v250
    %v257 = vpack.c.b16 %v253, %v252
    %v266 = vunpack.c.l.b16 %v40
    %v267 = vunpack.c.l.b16 %v41
    %v268 = vunpack.c.l.b16 %v42
    %v269 = vunpack.c.l.b16 %v43
    %v270 = vunpack.c.l.b16 %v44
    %v271 = vunpack.c.l.b16 %v45
    %v272 = vunpack.c.l.b16 %v46
    %v273 = vunpack.c.l.b16 %v47
    %v274 = vpack.c.b16 %v267, %v266
    %v275 = vpack.c.b16 %v269, %v268
    %v276 = vpack.c.b16 %v271, %v270
    %v277 = vpack.c.b16 %v273, %v272
    %v283 = vsel %vm196, %v254, 0
    %v286 = vsel %vm196, %v255, 0
    %v289 = vsel %vm196, %v256, 0
    %v292 = vsel %vm196, %v257, 0
    %294 = vmatpush.bf16.msra.mxu0 0
    %295 = vmatpush.bf16.msra.mxu0 0
    %296 = vmatpush.bf16.msra.mxu0 0
    %297 = vmatpush.bf16.msra.mxu0 0
    %298 = vmatpush.bf16.msra.mxu0 %v277
    %299 = vmatpush.bf16.msra.mxu0 %v276
    %300 = vmatpush.bf16.msra.mxu0 %v275
    %301 = vmatpush.bf16.msra.mxu0 %v274
    %302 = vmatmul.bf16.gmra.mxu0 %v283
    %v303 = vpop.f32.mrf.mxu0
    %v304 = vadd.f32 %v219, %v303
    %v305 = vpop.f32.mrf.mxu0
    %v306 = vadd.f32 %v221, %v305
    %307 = vmatmul.bf16.gmra.mxu0 %v286
    %v308 = vpop.f32.mrf.mxu0
    %v309 = vadd.f32 %v224, %v308
    %v310 = vpop.f32.mrf.mxu0
    %v311 = vadd.f32 %v226, %v310
    %312 = vmatmul.bf16.gmra.mxu0 %v289
    %v313 = vpop.f32.mrf.mxu0
    %v314 = vadd.f32 %v229, %v313
    %v315 = vpop.f32.mrf.mxu0
    %v316 = vadd.f32 %v231, %v315
    %317 = vmatmul.bf16.gmra.mxu0 %v292
    %v318 = vpop.f32.mrf.mxu0
    %v319 = vadd.f32 %v234, %v318
    %v320 = vpop.f32.mrf.mxu0
    %v321 = vadd.f32 %v236, %v320
    %322 = vdwg.mxu0
    %v323 = vld [vmem:[%s0] sm:$0xe]
    %v324 = vld [vmem:[%s0 + $0x10] sm:$0xe]
    %v325 = vld [vmem:[%s0 + $0x20] sm:$0xe]
    %v326 = vld [vmem:[%s0 + $0x30] sm:$0xe]
    %vm335 = vcmask 1042432
    %vm336 = vcmask 1046532
    %vm337 = vmor %vm335, %vm336
    %v338 = vrot.slane %v323, 5
    %v339 = vrot.slane %v338, 4
    %v340 = vrot.slane %v33, 5
    %v341 = vsel %vm337, %v339, %v340
    %v342 = vrot.slane %v340, 4
    %v343 = vrot.slane %v48, 5
    %v344 = vsel %vm337, %v342, %v343
    %v345 = vrot.slane %v324, 5
    %v346 = vrot.slane %v345, 4
    %v347 = vrot.slane %v35, 5
    %v348 = vsel %vm337, %v346, %v347
    %v349 = vrot.slane %v347, 4
    %v350 = vrot.slane %v49, 5
    %v351 = vsel %vm337, %v349, %v350
    %v352 = vrot.slane %v325, 5
    %v353 = vrot.slane %v352, 4
    %v354 = vrot.slane %v37, 5
    %v355 = vsel %vm337, %v353, %v354
    %v356 = vrot.slane %v354, 4
    %v357 = vrot.slane %v50, 5
    %v358 = vsel %vm337, %v356, %v357
    %v359 = vrot.slane %v326, 5
    %v360 = vrot.slane %v359, 4
    %v361 = vrot.slane %v39, 5
    %v362 = vsel %vm337, %v360, %v361
    %v363 = vrot.slane %v361, 4
    %v364 = vrot.slane %v51, 5
    %v365 = vsel %vm337, %v363, %v364
    %s366 = scalar_lea.vmem [#allocation2], 64
    %v367 = vld [vmem:[%s366] sm:$0xf]
    %v368 = vld [vmem:[%s366 + $0x4] sm:$0xf]
    %v369 = vld [vmem:[%s366 + $0x8] sm:$0xf]
    %v370 = vld [vmem:[%s366 + $0xc] sm:$0xf]
    %v371 = vld [vmem:[%s366 + $0x10] sm:$0xf]
    %v372 = vld [vmem:[%s366 + $0x14] sm:$0xf]
    %v373 = vld [vmem:[%s366 + $0x18] sm:$0xf]
    %v374 = vld [vmem:[%s366 + $0x1c] sm:$0xf]
    %v375 = vunpack.c.l.b16 %v341
    %v376 = vunpack.c.l.b16 %v344
    %v377 = vunpack.c.l.b16 %v348
    %v378 = vunpack.c.l.b16 %v351
    %v379 = vunpack.c.l.b16 %v355
    %v380 = vunpack.c.l.b16 %v358
    %v381 = vunpack.c.l.b16 %v362
    %v382 = vunpack.c.l.b16 %v365
    %v383 = vpack.c.b16 %v376, %v375
    %v384 = vpack.c.b16 %v378, %v377
    %v385 = vpack.c.b16 %v380, %v379
    %v386 = vpack.c.b16 %v382, %v381
    %v395 = vunpack.c.l.b16 %v367
    %v396 = vunpack.c.l.b16 %v368
    %v397 = vunpack.c.l.b16 %v369
    %v398 = vunpack.c.l.b16 %v370
    %v399 = vunpack.c.l.b16 %v371
    %v400 = vunpack.c.l.b16 %v372
    %v401 = vunpack.c.l.b16 %v373
    %v402 = vunpack.c.l.b16 %v374
    %v403 = vpack.c.b16 %v396, %v395
    %v404 = vpack.c.b16 %v398, %v397
    %v405 = vpack.c.b16 %v400, %v399
    %v406 = vpack.c.b16 %v402, %v401
    %v412 = vsel %vm196, %v383, 0
    %v415 = vsel %vm196, %v384, 0
    %v418 = vsel %vm196, %v385, 0
    %v421 = vsel %vm196, %v386, 0
    %423 = vmatpush.bf16.msra.mxu0 0
    %424 = vmatpush.bf16.msra.mxu0 0
    %425 = vmatpush.bf16.msra.mxu0 0
    %426 = vmatpush.bf16.msra.mxu0 0
    %427 = vmatpush.bf16.msra.mxu0 %v406
    %428 = vmatpush.bf16.msra.mxu0 %v405
    %429 = vmatpush.bf16.msra.mxu0 %v404
    %430 = vmatpush.bf16.msra.mxu0 %v403
    %431 = vmatmul.bf16.gmra.mxu0 %v412
    %v432 = vpop.f32.mrf.mxu0
    %v433 = vadd.f32 0.0, %v432
    %v434 = vpop.f32.mrf.mxu0
    %v435 = vadd.f32 0.0, %v434
    %436 = vmatmul.bf16.gmra.mxu0 %v415
    %v437 = vpop.f32.mrf.mxu0
    %v438 = vadd.f32 0.0, %v437
    %v439 = vpop.f32.mrf.mxu0
    %v440 = vadd.f32 0.0, %v439
    %441 = vmatmul.bf16.gmra.mxu0 %v418
    %v442 = vpop.f32.mrf.mxu0
    %v443 = vadd.f32 0.0, %v442
    %v444 = vpop.f32.mrf.mxu0
    %v445 = vadd.f32 0.0, %v444
    %446 = vmatmul.bf16.gmra.mxu0 %v421
    %v447 = vpop.f32.mrf.mxu0
    %v448 = vadd.f32 0.0, %v447
    %v449 = vpop.f32.mrf.mxu0
    %v450 = vadd.f32 0.0, %v449
    %451 = vdwg.mxu0
    %v452 = vadd.f32 %v304, %v433
    %v453 = vadd.f32 %v306, %v435
    %v454 = vadd.f32 %v309, %v438
    %v455 = vadd.f32 %v311, %v440
    %v456 = vadd.f32 %v314, %v443
    %v457 = vadd.f32 %v316, %v445
    %v458 = vadd.f32 %v319, %v448
    %v459 = vadd.f32 %v321, %v450
    %v460 = vld [vmem:[%s0 + $0x8] sm:$0x3]
    %v461 = vld [vmem:[%s0 + $0x18] sm:$0x3]
    %v462 = vld [vmem:[%s0 + $0x28] sm:$0x3]
    %v463 = vld [vmem:[%s0 + $0x38] sm:$0x3]
    %vm464 = vsmask.f32 2304
    %vm465 = vsmask.f32 6416
    %vm466 = vmor %vm464, %vm465
    %v468 = vshrl.u32 %v323, 16
    %v470 = vrot.slane %v468, 5
    %v471 = vshll.u32 %v323, 16
    %v473 = vrot.slane %v471, 6
    %v474 = vor.u32 %v470, %v473
    %v475 = vrot.slane %v474, 4
    %v476 = vrot.slane %v69, 5
    %v477 = vrot.slane %v65, 6
    %v478 = vor.u32 %v476, %v477
    %v479 = vsel %vm466, %v475, %v478
    %v480 = vrot.slane %v478, 4
    %v482 = vshrl.u32 %v460, 16
    %v484 = vrot.slane %v482, 5
    %v485 = vshll.u32 %v460, 16
    %v487 = vrot.slane %v485, 6
    %v488 = vor.u32 %v484, %v487
    %v489 = vsel %vm466, %v480, %v488
    %v491 = vshrl.u32 %v324, 16
    %v493 = vrot.slane %v491, 5
    %v494 = vshll.u32 %v324, 16
    %v496 = vrot.slane %v494, 6
    %v497 = vor.u32 %v493, %v496
    %v498 = vrot.slane %v497, 4
    %v499 = vrot.slane %v93, 5
    %v500 = vrot.slane %v89, 6
    %v501 = vor.u32 %v499, %v500
    %v502 = vsel %vm466, %v498, %v501
    %v503 = vrot.slane %v501, 4
    %v505 = vshrl.u32 %v461, 16
    %v507 = vrot.slane %v505, 5
    %v508 = vshll.u32 %v461, 16
    %v510 = vrot.slane %v508, 6
    %v511 = vor.u32 %v507, %v510
    %v512 = vsel %vm466, %v503, %v511
    %v514 = vshrl.u32 %v325, 16
    %v516 = vrot.slane %v514, 5
    %v517 = vshll.u32 %v325, 16
    %v519 = vrot.slane %v517, 6
    %v520 = vor.u32 %v516, %v519
    %v521 = vrot.slane %v520, 4
    %v522 = vrot.slane %v117, 5
    %v523 = vrot.slane %v113, 6
    %v524 = vor.u32 %v522, %v523
    %v525 = vsel %vm466, %v521, %v524
    %v526 = vrot.slane %v524, 4
    %v528 = vshrl.u32 %v462, 16
    %v530 = vrot.slane %v528, 5
    %v531 = vshll.u32 %v462, 16
    %v533 = vrot.slane %v531, 6
    %v534 = vor.u32 %v530, %v533
    %v535 = vsel %vm466, %v526, %v534
    %v537 = vshrl.u32 %v326, 16
    %v539 = vrot.slane %v537, 5
    %v540 = vshll.u32 %v326, 16
    %v542 = vrot.slane %v540, 6
    %v543 = vor.u32 %v539, %v542
    %v544 = vrot.slane %v543, 4
    %v545 = vrot.slane %v141, 5
    %v546 = vrot.slane %v137, 6
    %v547 = vor.u32 %v545, %v546
    %v548 = vsel %vm466, %v544, %v547
    %v549 = vrot.slane %v547, 4
    %v551 = vshrl.u32 %v463, 16
    %v553 = vrot.slane %v551, 5
    %v554 = vshll.u32 %v463, 16
    %v556 = vrot.slane %v554, 6
    %v557 = vor.u32 %v553, %v556
    %v558 = vsel %vm466, %v549, %v557
    %s559 = scalar_lea.vmem [#allocation2], 96
    %v560 = vld [vmem:[%s559] sm:$0xf]
    %v561 = vld [vmem:[%s559 + $0x4] sm:$0xf]
    %v562 = vld [vmem:[%s559 + $0x8] sm:$0xf]
    %v563 = vld [vmem:[%s559 + $0xc] sm:$0xf]
    %v564 = vld [vmem:[%s559 + $0x10] sm:$0xf]
    %v565 = vld [vmem:[%s559 + $0x14] sm:$0xf]
    %v566 = vld [vmem:[%s559 + $0x18] sm:$0xf]
    %v567 = vld [vmem:[%s559 + $0x1c] sm:$0xf]
    %v568 = vunpack.c.l.b16 %v479
    %v569 = vunpack.c.l.b16 %v489
    %v570 = vunpack.c.l.b16 %v502
    %v571 = vunpack.c.l.b16 %v512
    %v572 = vunpack.c.l.b16 %v525
    %v573 = vunpack.c.l.b16 %v535
    %v574 = vunpack.c.l.b16 %v548
    %v575 = vunpack.c.l.b16 %v558
    %v576 = vpack.c.b16 %v569, %v568
    %v577 = vpack.c.b16 %v571, %v570
    %v578 = vpack.c.b16 %v573, %v572
    %v579 = vpack.c.b16 %v575, %v574
    %v588 = vunpack.c.l.b16 %v560
    %v589 = vunpack.c.l.b16 %v561
    %v590 = vunpack.c.l.b16 %v562
    %v591 = vunpack.c.l.b16 %v563
    %v592 = vunpack.c.l.b16 %v564
    %v593 = vunpack.c.l.b16 %v565
    %v594 = vunpack.c.l.b16 %v566
    %v595 = vunpack.c.l.b16 %v567
    %v596 = vpack.c.b16 %v589, %v588
    %v597 = vpack.c.b16 %v591, %v590
    %v598 = vpack.c.b16 %v593, %v592
    %v599 = vpack.c.b16 %v595, %v594
    %v605 = vsel %vm196, %v576, 0
    %v608 = vsel %vm196, %v577, 0
    %v611 = vsel %vm196, %v578, 0
    %v614 = vsel %vm196, %v579, 0
    %616 = vmatpush.bf16.msra.mxu0 0
    %617 = vmatpush.bf16.msra.mxu0 0
    %618 = vmatpush.bf16.msra.mxu0 0
    %619 = vmatpush.bf16.msra.mxu0 0
    %620 = vmatpush.bf16.msra.mxu0 %v599
    %621 = vmatpush.bf16.msra.mxu0 %v598
    %622 = vmatpush.bf16.msra.mxu0 %v597
    %623 = vmatpush.bf16.msra.mxu0 %v596
    %624 = vmatmul.bf16.gmra.mxu0 %v605
    %v625 = vpop.f32.mrf.mxu0
    %v626 = vadd.f32 0.0, %v625
    %v627 = vpop.f32.mrf.mxu0
    %v628 = vadd.f32 0.0, %v627
    %629 = vmatmul.bf16.gmra.mxu0 %v608
    %v630 = vpop.f32.mrf.mxu0
    %v631 = vadd.f32 0.0, %v630
    %v632 = vpop.f32.mrf.mxu0
    %v633 = vadd.f32 0.0, %v632
    %634 = vmatmul.bf16.gmra.mxu0 %v611
    %v635 = vpop.f32.mrf.mxu0
    %v636 = vadd.f32 0.0, %v635
    %v637 = vpop.f32.mrf.mxu0
    %v638 = vadd.f32 0.0, %v637
    %639 = vmatmul.bf16.gmra.mxu0 %v614
    %v640 = vpop.f32.mrf.mxu0
    %v641 = vadd.f32 0.0, %v640
    %v642 = vpop.f32.mrf.mxu0
    %v643 = vadd.f32 0.0, %v642
    %644 = vdwg.mxu0
    %v645 = vadd.f32 %v452, %v626
    %v646 = vadd.f32 %v453, %v628
    %v647 = vadd.f32 %v454, %v631
    %v648 = vadd.f32 %v455, %v633
    %v649 = vadd.f32 %v456, %v636
    %v650 = vadd.f32 %v457, %v638
    %v651 = vadd.f32 %v458, %v641
    %v652 = vadd.f32 %v459, %v643
    %v653 = vld [vmem:[%s0] sm:$0xc]
    %v654 = vld [vmem:[%s0 + $0x10] sm:$0xc]
    %v655 = vld [vmem:[%s0 + $0x20] sm:$0xc]
    %v656 = vld [vmem:[%s0 + $0x30] sm:$0xc]
    %vm665 = vcmask 1041408
    %vm666 = vcmask 1045508
    %vm667 = vmor %vm665, %vm666
    %v668 = vrot.slane %v653, 6
    %v669 = vrot.slane %v668, 4
    %v670 = vrot.slane %v33, 6
    %v671 = vsel %vm667, %v669, %v670
    %v672 = vrot.slane %v670, 4
    %v673 = vrot.slane %v460, 6
    %v674 = vsel %vm667, %v672, %v673
    %v675 = vrot.slane %v654, 6
    %v676 = vrot.slane %v675, 4
    %v677 = vrot.slane %v35, 6
    %v678 = vsel %vm667, %v676, %v677
    %v679 = vrot.slane %v677, 4
    %v680 = vrot.slane %v461, 6
    %v681 = vsel %vm667, %v679, %v680
    %v682 = vrot.slane %v655, 6
    %v683 = vrot.slane %v682, 4
    %v684 = vrot.slane %v37, 6
    %v685 = vsel %vm667, %v683, %v684
    %v686 = vrot.slane %v684, 4
    %v687 = vrot.slane %v462, 6
    %v688 = vsel %vm667, %v686, %v687
    %v689 = vrot.slane %v656, 6
    %v690 = vrot.slane %v689, 4
    %v691 = vrot.slane %v39, 6
    %v692 = vsel %vm667, %v690, %v691
    %v693 = vrot.slane %v691, 4
    %v694 = vrot.slane %v463, 6
    %v695 = vsel %vm667, %v693, %v694
    %s696 = scalar_lea.vmem [#allocation2], 128
    %v697 = vld [vmem:[%s696] sm:$0xf]
    %v698 = vld [vmem:[%s696 + $0x4] sm:$0xf]
    %v699 = vld [vmem:[%s696 + $0x8] sm:$0xf]
    %v700 = vld [vmem:[%s696 + $0xc] sm:$0xf]
    %v701 = vld [vmem:[%s696 + $0x10] sm:$0xf]
    %v702 = vld [vmem:[%s696 + $0x14] sm:$0xf]
    %v703 = vld [vmem:[%s696 + $0x18] sm:$0xf]
    %v704 = vld [vmem:[%s696 + $0x1c] sm:$0xf]
    %v705 = vunpack.c.l.b16 %v671
    %v706 = vunpack.c.l.b16 %v674
    %v707 = vunpack.c.l.b16 %v678
    %v708 = vunpack.c.l.b16 %v681
    %v709 = vunpack.c.l.b16 %v685
    %v710 = vunpack.c.l.b16 %v688
    %v711 = vunpack.c.l.b16 %v692
    %v712 = vunpack.c.l.b16 %v695
    %v713 = vpack.c.b16 %v706, %v705
    %v714 = vpack.c.b16 %v708, %v707
    %v715 = vpack.c.b16 %v710, %v709
    %v716 = vpack.c.b16 %v712, %v711
    %v725 = vunpack.c.l.b16 %v697
    %v726 = vunpack.c.l.b16 %v698
    %v727 = vunpack.c.l.b16 %v699
    %v728 = vunpack.c.l.b16 %v700
    %v729 = vunpack.c.l.b16 %v701
    %v730 = vunpack.c.l.b16 %v702
    %v731 = vunpack.c.l.b16 %v703
    %v732 = vunpack.c.l.b16 %v704
    %v733 = vpack.c.b16 %v726, %v725
    %v734 = vpack.c.b16 %v728, %v727
    %v735 = vpack.c.b16 %v730, %v729
    %v736 = vpack.c.b16 %v732, %v731
    %v742 = vsel %vm196, %v713, 0
    %v745 = vsel %vm196, %v714, 0
    %v748 = vsel %vm196, %v715, 0
    %v751 = vsel %vm196, %v716, 0
    %753 = vmatpush.bf16.msra.mxu0 0
    %754 = vmatpush.bf16.msra.mxu0 0
    %755 = vmatpush.bf16.msra.mxu0 0
    %756 = vmatpush.bf16.msra.mxu0 0
    %757 = vmatpush.bf16.msra.mxu0 %v736
    %758 = vmatpush.bf16.msra.mxu0 %v735
    %759 = vmatpush.bf16.msra.mxu0 %v734
    %760 = vmatpush.bf16.msra.mxu0 %v733
    %761 = vmatmul.bf16.gmra.mxu0 %v742
    %v762 = vpop.f32.mrf.mxu0
    %v763 = vadd.f32 0.0, %v762
    %v764 = vpop.f32.mrf.mxu0
    %v765 = vadd.f32 0.0, %v764
    %766 = vmatmul.bf16.gmra.mxu0 %v745
    %v767 = vpop.f32.mrf.mxu0
    %v768 = vadd.f32 0.0, %v767
    %v769 = vpop.f32.mrf.mxu0
    %v770 = vadd.f32 0.0, %v769
    %771 = vmatmul.bf16.gmra.mxu0 %v748
    %v772 = vpop.f32.mrf.mxu0
    %v773 = vadd.f32 0.0, %v772
    %v774 = vpop.f32.mrf.mxu0
    %v775 = vadd.f32 0.0, %v774
    %776 = vmatmul.bf16.gmra.mxu0 %v751
    %v777 = vpop.f32.mrf.mxu0
    %v778 = vadd.f32 0.0, %v777
    %v779 = vpop.f32.mrf.mxu0
    %v780 = vadd.f32 0.0, %v779
    %781 = vdwg.mxu0
    %v782 = vadd.f32 %v645, %v763
    %v783 = vadd.f32 %v646, %v765
    %v784 = vadd.f32 %v647, %v768
    %v785 = vadd.f32 %v648, %v770
    %v786 = vadd.f32 %v649, %v773
    %v787 = vadd.f32 %v650, %v775
    %v788 = vadd.f32 %v651, %v778
    %v789 = vadd.f32 %v652, %v780
    %v790 = vld [vmem:[%s0 + $0x8] sm:$0x7]
    %v791 = vld [vmem:[%s0 + $0x18] sm:$0x7]
    %v792 = vld [vmem:[%s0 + $0x28] sm:$0x7]
    %v793 = vld [vmem:[%s0 + $0x38] sm:$0x7]
    %vm794 = vsmask.f32 1280
    %vm795 = vsmask.f32 5392
    %vm796 = vmor %vm794, %vm795
    %v798 = vshrl.u32 %v653, 16
    %v800 = vrot.slane %v798, 6
    %v801 = vshll.u32 %v653, 16
    %v803 = vrot.slane %v801, 7
    %v804 = vor.u32 %v800, %v803
    %v805 = vrot.slane %v804, 4
    %v806 = vrot.slane %v69, 6
    %v807 = vrot.slane %v65, 7
    %v808 = vor.u32 %v806, %v807
    %v809 = vsel %vm796, %v805, %v808
    %v810 = vrot.slane %v808, 4
    %v812 = vshrl.u32 %v790, 16
    %v814 = vrot.slane %v812, 6
    %v815 = vshll.u32 %v790, 16
    %v817 = vrot.slane %v815, 7
    %v818 = vor.u32 %v814, %v817
    %v819 = vsel %vm796, %v810, %v818
    %v821 = vshrl.u32 %v654, 16
    %v823 = vrot.slane %v821, 6
    %v824 = vshll.u32 %v654, 16
    %v826 = vrot.slane %v824, 7
    %v827 = vor.u32 %v823, %v826
    %v828 = vrot.slane %v827, 4
    %v829 = vrot.slane %v93, 6
    %v830 = vrot.slane %v89, 7
    %v831 = vor.u32 %v829, %v830
    %v832 = vsel %vm796, %v828, %v831
    %v833 = vrot.slane %v831, 4
    %v835 = vshrl.u32 %v791, 16
    %v837 = vrot.slane %v835, 6
    %v838 = vshll.u32 %v791, 16
    %v840 = vrot.slane %v838, 7
    %v841 = vor.u32 %v837, %v840
    %v842 = vsel %vm796, %v833, %v841
    %v844 = vshrl.u32 %v655, 16
    %v846 = vrot.slane %v844, 6
    %v847 = vshll.u32 %v655, 16
    %v849 = vrot.slane %v847, 7
    %v850 = vor.u32 %v846, %v849
    %v851 = vrot.slane %v850, 4
    %v852 = vrot.slane %v117, 6
    %v853 = vrot.slane %v113, 7
    %v854 = vor.u32 %v852, %v853
    %v855 = vsel %vm796, %v851, %v854
    %v856 = vrot.slane %v854, 4
    %v858 = vshrl.u32 %v792, 16
    %v860 = vrot.slane %v858, 6
    %v861 = vshll.u32 %v792, 16
    %v863 = vrot.slane %v861, 7
    %v864 = vor.u32 %v860, %v863
    %v865 = vsel %vm796, %v856, %v864
    %v867 = vshrl.u32 %v656, 16
    %v869 = vrot.slane %v867, 6
    %v870 = vshll.u32 %v656, 16
    %v872 = vrot.slane %v870, 7
    %v873 = vor.u32 %v869, %v872
    %v874 = vrot.slane %v873, 4
    %v875 = vrot.slane %v141, 6
    %v876 = vrot.slane %v137, 7
    %v877 = vor.u32 %v875, %v876
    %v878 = vsel %vm796, %v874, %v877
    %v879 = vrot.slane %v877, 4
    %v881 = vshrl.u32 %v793, 16
    %v883 = vrot.slane %v881, 6
    %v884 = vshll.u32 %v793, 16
    %v886 = vrot.slane %v884, 7
    %v887 = vor.u32 %v883, %v886
    %v888 = vsel %vm796, %v879, %v887
    %s889 = scalar_lea.vmem [#allocation2], 160
    %v890 = vld [vmem:[%s889] sm:$0xf]
    %v891 = vld [vmem:[%s889 + $0x4] sm:$0xf]
    %v892 = vld [vmem:[%s889 + $0x8] sm:$0xf]
    %v893 = vld [vmem:[%s889 + $0xc] sm:$0xf]
    %v894 = vld [vmem:[%s889 + $0x10] sm:$0xf]
    %v895 = vld [vmem:[%s889 + $0x14] sm:$0xf]
    %v896 = vld [vmem:[%s889 + $0x18] sm:$0xf]
    %v897 = vld [vmem:[%s889 + $0x1c] sm:$0xf]
    %v898 = vunpack.c.l.b16 %v809
    %v899 = vunpack.c.l.b16 %v819
    %v900 = vunpack.c.l.b16 %v832
    %v901 = vunpack.c.l.b16 %v842
    %v902 = vunpack.c.l.b16 %v855
    %v903 = vunpack.c.l.b16 %v865
    %v904 = vunpack.c.l.b16 %v878
    %v905 = vunpack.c.l.b16 %v888
    %v906 = vpack.c.b16 %v899, %v898
    %v907 = vpack.c.b16 %v901, %v900
    %v908 = vpack.c.b16 %v903, %v902
    %v909 = vpack.c.b16 %v905, %v904
    %v918 = vunpack.c.l.b16 %v890
    %v919 = vunpack.c.l.b16 %v891
    %v920 = vunpack.c.l.b16 %v892
    %v921 = vunpack.c.l.b16 %v893
    %v922 = vunpack.c.l.b16 %v894
    %v923 = vunpack.c.l.b16 %v895
    %v924 = vunpack.c.l.b16 %v896
    %v925 = vunpack.c.l.b16 %v897
    %v926 = vpack.c.b16 %v919, %v918
    %v927 = vpack.c.b16 %v921, %v920
    %v928 = vpack.c.b16 %v923, %v922
    %v929 = vpack.c.b16 %v925, %v924
    %v935 = vsel %vm196, %v906, 0
    %v938 = vsel %vm196, %v907, 0
    %v941 = vsel %vm196, %v908, 0
    %v944 = vsel %vm196, %v909, 0
    %946 = vmatpush.bf16.msra.mxu0 0
    %947 = vmatpush.bf16.msra.mxu0 0
    %948 = vmatpush.bf16.msra.mxu0 0
    %949 = vmatpush.bf16.msra.mxu0 0
    %950 = vmatpush.bf16.msra.mxu0 %v929
    %951 = vmatpush.bf16.msra.mxu0 %v928
    %952 = vmatpush.bf16.msra.mxu0 %v927
    %953 = vmatpush.bf16.msra.mxu0 %v926
    %954 = vmatmul.bf16.gmra.mxu0 %v935
    %v955 = vpop.f32.mrf.mxu0
    %v956 = vadd.f32 0.0, %v955
    %v957 = vpop.f32.mrf.mxu0
    %v958 = vadd.f32 0.0, %v957
    %959 = vmatmul.bf16.gmra.mxu0 %v938
    %v960 = vpop.f32.mrf.mxu0
    %v961 = vadd.f32 0.0, %v960
    %v962 = vpop.f32.mrf.mxu0
    %v963 = vadd.f32 0.0, %v962
    %964 = vmatmul.bf16.gmra.mxu0 %v941
    %v965 = vpop.f32.mrf.mxu0
    %v966 = vadd.f32 0.0, %v965
    %v967 = vpop.f32.mrf.mxu0
    %v968 = vadd.f32 0.0, %v967
    %969 = vmatmul.bf16.gmra.mxu0 %v944
    %v970 = vpop.f32.mrf.mxu0
    %v971 = vadd.f32 0.0, %v970
    %v972 = vpop.f32.mrf.mxu0
    %v973 = vadd.f32 0.0, %v972
    %974 = vdwg.mxu0
    %v975 = vadd.f32 %v782, %v956
    %v976 = vadd.f32 %v783, %v958
    %v977 = vadd.f32 %v784, %v961
    %v978 = vadd.f32 %v785, %v963
    %v979 = vadd.f32 %v786, %v966
    %v980 = vadd.f32 %v787, %v968
    %v981 = vadd.f32 %v788, %v971
    %v982 = vadd.f32 %v789, %v973
    %v983 = vld [vmem:[%s0] sm:$0x8]
    %v984 = vld [vmem:[%s0 + $0x10] sm:$0x8]
    %v985 = vld [vmem:[%s0 + $0x20] sm:$0x8]
    %v986 = vld [vmem:[%s0 + $0x30] sm:$0x8]
    %vm995 = vcmask 1040384
    %vm996 = vcmask 1044484
    %vm997 = vmor %vm995, %vm996
    %v998 = vrot.slane %v983, 7
    %v999 = vrot.slane %v998, 4
    %v1000 = vrot.slane %v33, 7
    %v1001 = vsel %vm997, %v999, %v1000
    %v1002 = vrot.slane %v1000, 4
    %v1003 = vrot.slane %v790, 7
    %v1004 = vsel %vm997, %v1002, %v1003
    %v1005 = vrot.slane %v984, 7
    %v1006 = vrot.slane %v1005, 4
    %v1007 = vrot.slane %v35, 7
    %v1008 = vsel %vm997, %v1006, %v1007
    %v1009 = vrot.slane %v1007, 4
    %v1010 = vrot.slane %v791, 7
    %v1011 = vsel %vm997, %v1009, %v1010
    %v1012 = vrot.slane %v985, 7
    %v1013 = vrot.slane %v1012, 4
    %v1014 = vrot.slane %v37, 7
    %v1015 = vsel %vm997, %v1013, %v1014
    %v1016 = vrot.slane %v1014, 4
    %v1017 = vrot.slane %v792, 7
    %v1018 = vsel %vm997, %v1016, %v1017
    %v1019 = vrot.slane %v986, 7
    %v1020 = vrot.slane %v1019, 4
    %v1021 = vrot.slane %v39, 7
    %v1022 = vsel %vm997, %v1020, %v1021
    %v1023 = vrot.slane %v1021, 4
    %v1024 = vrot.slane %v793, 7
    %v1025 = vsel %vm997, %v1023, %v1024
    %s1026 = scalar_lea.vmem [#allocation2], 192
    %v1027 = vld [vmem:[%s1026] sm:$0xf]
    %v1028 = vld [vmem:[%s1026 + $0x4] sm:$0xf]
    %v1029 = vld [vmem:[%s1026 + $0x8] sm:$0xf]
    %v1030 = vld [vmem:[%s1026 + $0xc] sm:$0xf]
    %v1031 = vld [vmem:[%s1026 + $0x10] sm:$0xf]
    %v1032 = vld [vmem:[%s1026 + $0x14] sm:$0xf]
    %v1033 = vld [vmem:[%s1026 + $0x18] sm:$0xf]
    %v1034 = vld [vmem:[%s1026 + $0x1c] sm:$0xf]
    %v1035 = vunpack.c.l.b16 %v1001
    %v1036 = vunpack.c.l.b16 %v1004
    %v1037 = vunpack.c.l.b16 %v1008
    %v1038 = vunpack.c.l.b16 %v1011
    %v1039 = vunpack.c.l.b16 %v1015
    %v1040 = vunpack.c.l.b16 %v1018
    %v1041 = vunpack.c.l.b16 %v1022
    %v1042 = vunpack.c.l.b16 %v1025
    %v1043 = vpack.c.b16 %v1036, %v1035
    %v1044 = vpack.c.b16 %v1038, %v1037
    %v1045 = vpack.c.b16 %v1040, %v1039
    %v1046 = vpack.c.b16 %v1042, %v1041
    %v1055 = vunpack.c.l.b16 %v1027
    %v1056 = vunpack.c.l.b16 %v1028
    %v1057 = vunpack.c.l.b16 %v1029
    %v1058 = vunpack.c.l.b16 %v1030
    %v1059 = vunpack.c.l.b16 %v1031
    %v1060 = vunpack.c.l.b16 %v1032
    %v1061 = vunpack.c.l.b16 %v1033
    %v1062 = vunpack.c.l.b16 %v1034
    %v1063 = vpack.c.b16 %v1056, %v1055
    %v1064 = vpack.c.b16 %v1058, %v1057
    %v1065 = vpack.c.b16 %v1060, %v1059
    %v1066 = vpack.c.b16 %v1062, %v1061
    %v1072 = vsel %vm196, %v1043, 0
    %v1075 = vsel %vm196, %v1044, 0
    %v1078 = vsel %vm196, %v1045, 0
    %v1081 = vsel %vm196, %v1046, 0
    %1083 = vmatpush.bf16.msra.mxu0 0
    %1084 = vmatpush.bf16.msra.mxu0 0
    %1085 = vmatpush.bf16.msra.mxu0 0
    %1086 = vmatpush.bf16.msra.mxu0 0
    %1087 = vmatpush.bf16.msra.mxu0 %v1066
    %1088 = vmatpush.bf16.msra.mxu0 %v1065
    %1089 = vmatpush.bf16.msra.mxu0 %v1064
    %1090 = vmatpush.bf16.msra.mxu0 %v1063
    %1091 = vmatmul.bf16.gmra.mxu0 %v1072
    %v1092 = vpop.f32.mrf.mxu0
    %v1093 = vadd.f32 0.0, %v1092
    %v1094 = vpop.f32.mrf.mxu0
    %v1095 = vadd.f32 0.0, %v1094
    %1096 = vmatmul.bf16.gmra.mxu0 %v1075
    %v1097 = vpop.f32.mrf.mxu0
    %v1098 = vadd.f32 0.0, %v1097
    %v1099 = vpop.f32.mrf.mxu0
    %v1100 = vadd.f32 0.0, %v1099
    %1101 = vmatmul.bf16.gmra.mxu0 %v1078
    %v1102 = vpop.f32.mrf.mxu0
    %v1103 = vadd.f32 0.0, %v1102
    %v1104 = vpop.f32.mrf.mxu0
    %v1105 = vadd.f32 0.0, %v1104
    %1106 = vmatmul.bf16.gmra.mxu0 %v1081
    %v1107 = vpop.f32.mrf.mxu0
    %v1108 = vadd.f32 0.0, %v1107
    %v1109 = vpop.f32.mrf.mxu0
    %v1110 = vadd.f32 0.0, %v1109
    %1111 = vdwg.mxu0
    %v1112 = vadd.f32 %v975, %v1093
    %v1113 = vadd.f32 %v976, %v1095
    %v1114 = vadd.f32 %v977, %v1098
    %v1115 = vadd.f32 %v978, %v1100
    %v1116 = vadd.f32 %v979, %v1103
    %v1117 = vadd.f32 %v980, %v1105
    %v1118 = vadd.f32 %v981, %v1108
    %v1119 = vadd.f32 %v982, %v1110
    %v1120 = vld [vmem:[%s0 + $0x8] sm:$0xf]
    %v1121 = vld [vmem:[%s0 + $0x18] sm:$0xf]
    %v1122 = vld [vmem:[%s0 + $0x28] sm:$0xf]
    %v1123 = vld [vmem:[%s0 + $0x38] sm:$0xf]
    %vm1124 = vsmask.f32 256
    %vm1125 = vsmask.f32 4368
    %vm1126 = vmor %vm1124, %vm1125
    %v1128 = vshrl.u32 %v983, 16
    %v1130 = vrot.slane %v1128, 7
    %v1131 = vrot.slane %v1130, 4
    %v1132 = vrot.slane %v69, 7
    %v1133 = vor.u32 %v1132, %v65
    %v1134 = vsel %vm1126, %v1131, %v1133
    %v1135 = vrot.slane %v1132, 4
    %v1137 = vshrl.u32 %v1120, 16
    %v1139 = vrot.slane %v1137, 7
    %v1140 = vshll.u32 %v1120, 16
    %v1142 = vor.u32 %v1139, %v1140
    %v1143 = vsel %vm1126, %v1135, %v1142
    %v1145 = vshrl.u32 %v984, 16
    %v1147 = vrot.slane %v1145, 7
    %v1148 = vrot.slane %v1147, 4
    %v1149 = vrot.slane %v93, 7
    %v1150 = vor.u32 %v1149, %v89
    %v1151 = vsel %vm1126, %v1148, %v1150
    %v1152 = vrot.slane %v1149, 4
    %v1154 = vshrl.u32 %v1121, 16
    %v1156 = vrot.slane %v1154, 7
    %v1157 = vshll.u32 %v1121, 16
    %v1159 = vor.u32 %v1156, %v1157
    %v1160 = vsel %vm1126, %v1152, %v1159
    %v1162 = vshrl.u32 %v985, 16
    %v1164 = vrot.slane %v1162, 7
    %v1165 = vrot.slane %v1164, 4
    %v1166 = vrot.slane %v117, 7
    %v1167 = vor.u32 %v1166, %v113
    %v1168 = vsel %vm1126, %v1165, %v1167
    %v1169 = vrot.slane %v1166, 4
    %v1171 = vshrl.u32 %v1122, 16
    %v1173 = vrot.slane %v1171, 7
    %v1174 = vshll.u32 %v1122, 16
    %v1176 = vor.u32 %v1173, %v1174
    %v1177 = vsel %vm1126, %v1169, %v1176
    %v1179 = vshrl.u32 %v986, 16
    %v1181 = vrot.slane %v1179, 7
    %v1182 = vrot.slane %v1181, 4
    %v1183 = vrot.slane %v141, 7
    %v1184 = vor.u32 %v1183, %v137
    %v1185 = vsel %vm1126, %v1182, %v1184
    %v1186 = vrot.slane %v1183, 4
    %v1188 = vshrl.u32 %v1123, 16
    %v1190 = vrot.slane %v1188, 7
    %v1191 = vshll.u32 %v1123, 16
    %v1193 = vor.u32 %v1190, %v1191
    %v1194 = vsel %vm1126, %v1186, %v1193
    %s1195 = scalar_lea.vmem [#allocation2], 224
    %v1196 = vld [vmem:[%s1195] sm:$0xf]
    %v1197 = vld [vmem:[%s1195 + $0x4] sm:$0xf]
    %v1198 = vld [vmem:[%s1195 + $0x8] sm:$0xf]
    %v1199 = vld [vmem:[%s1195 + $0xc] sm:$0xf]
    %v1200 = vld [vmem:[%s1195 + $0x10] sm:$0xf]
    %v1201 = vld [vmem:[%s1195 + $0x14] sm:$0xf]
    %v1202 = vld [vmem:[%s1195 + $0x18] sm:$0xf]
    %v1203 = vld [vmem:[%s1195 + $0x1c] sm:$0xf]
    %v1204 = vunpack.c.l.b16 %v1134
    %v1205 = vunpack.c.l.b16 %v1143
    %v1206 = vunpack.c.l.b16 %v1151
    %v1207 = vunpack.c.l.b16 %v1160
    %v1208 = vunpack.c.l.b16 %v1168
    %v1209 = vunpack.c.l.b16 %v1177
    %v1210 = vunpack.c.l.b16 %v1185
    %v1211 = vunpack.c.l.b16 %v1194
    %v1212 = vpack.c.b16 %v1205, %v1204
    %v1213 = vpack.c.b16 %v1207, %v1206
    %v1214 = vpack.c.b16 %v1209, %v1208
    %v1215 = vpack.c.b16 %v1211, %v1210
    %v1224 = vunpack.c.l.b16 %v1196
    %v1225 = vunpack.c.l.b16 %v1197
    %v1226 = vunpack.c.l.b16 %v1198
    %v1227 = vunpack.c.l.b16 %v1199
    %v1228 = vunpack.c.l.b16 %v1200
    %v1229 = vunpack.c.l.b16 %v1201
    %v1230 = vunpack.c.l.b16 %v1202
    %v1231 = vunpack.c.l.b16 %v1203
    %v1232 = vpack.c.b16 %v1225, %v1224
    %v1233 = vpack.c.b16 %v1227, %v1226
    %v1234 = vpack.c.b16 %v1229, %v1228
    %v1235 = vpack.c.b16 %v1231, %v1230
    %v1241 = vsel %vm196, %v1212, 0
    %v1244 = vsel %vm196, %v1213, 0
    %v1247 = vsel %vm196, %v1214, 0
    %v1250 = vsel %vm196, %v1215, 0
    %1252 = vmatpush.bf16.msra.mxu0 0
    %1253 = vmatpush.bf16.msra.mxu0 0
    %1254 = vmatpush.bf16.msra.mxu0 0
    %1255 = vmatpush.bf16.msra.mxu0 0
    %1256 = vmatpush.bf16.msra.mxu0 %v1235
    %1257 = vmatpush.bf16.msra.mxu0 %v1234
    %1258 = vmatpush.bf16.msra.mxu0 %v1233
    %1259 = vmatpush.bf16.msra.mxu0 %v1232
    %1260 = vmatmul.bf16.gmra.mxu0 %v1241
    %v1261 = vpop.f32.mrf.mxu0
    %v1262 = vadd.f32 0.0, %v1261
    %v1263 = vpop.f32.mrf.mxu0
    %v1264 = vadd.f32 0.0, %v1263
    %1265 = vmatmul.bf16.gmra.mxu0 %v1244
    %v1266 = vpop.f32.mrf.mxu0
    %v1267 = vadd.f32 0.0, %v1266
    %v1268 = vpop.f32.mrf.mxu0
    %v1269 = vadd.f32 0.0, %v1268
    %1270 = vmatmul.bf16.gmra.mxu0 %v1247
    %v1271 = vpop.f32.mrf.mxu0
    %v1272 = vadd.f32 0.0, %v1271
    %v1273 = vpop.f32.mrf.mxu0
    %v1274 = vadd.f32 0.0, %v1273
    %1275 = vmatmul.bf16.gmra.mxu0 %v1250
    %v1276 = vpop.f32.mrf.mxu0
    %v1277 = vadd.f32 0.0, %v1276
    %v1278 = vpop.f32.mrf.mxu0
    %v1279 = vadd.f32 0.0, %v1278
    %1280 = vdwg.mxu0
    %v1281 = vadd.f32 %v1112, %v1262
    %v1282 = vadd.f32 %v1113, %v1264
    %v1283 = vadd.f32 %v1114, %v1267
    %v1284 = vadd.f32 %v1115, %v1269
    %v1285 = vadd.f32 %v1116, %v1272
    %v1286 = vadd.f32 %v1117, %v1274
    %v1287 = vadd.f32 %v1118, %v1277
    %v1288 = vadd.f32 %v1119, %v1279
    %s1289 = scalar_lea.vmem [#allocation2], 256
    %v1290 = vld [vmem:[%s1289] sm:$0xf]
    %v1291 = vld [vmem:[%s1289 + $0x4] sm:$0xf]
    %v1292 = vld [vmem:[%s1289 + $0x8] sm:$0xf]
    %v1293 = vld [vmem:[%s1289 + $0xc] sm:$0xf]
    %v1294 = vld [vmem:[%s1289 + $0x10] sm:$0xf]
    %v1295 = vld [vmem:[%s1289 + $0x14] sm:$0xf]
    %v1296 = vld [vmem:[%s1289 + $0x18] sm:$0xf]
    %v1297 = vld [vmem:[%s1289 + $0x1c] sm:$0xf]
    %v1302 = vunpack.c.l.b16 %v1120
    %v1303 = vunpack.c.l.b16 %v1121
    %v1304 = vunpack.c.l.b16 %v1122
    %v1305 = vunpack.c.l.b16 %v1123
    %v1306 = vpack.c.b16 %v1302, %v247
    %v1307 = vpack.c.b16 %v1303, %v249
    %v1308 = vpack.c.b16 %v1304, %v251
    %v1309 = vpack.c.b16 %v1305, %v253
    %v1318 = vunpack.c.l.b16 %v1290
    %v1319 = vunpack.c.l.b16 %v1291
    %v1320 = vunpack.c.l.b16 %v1292
    %v1321 = vunpack.c.l.b16 %v1293
    %v1322 = vunpack.c.l.b16 %v1294
    %v1323 = vunpack.c.l.b16 %v1295
    %v1324 = vunpack.c.l.b16 %v1296
    %v1325 = vunpack.c.l.b16 %v1297
    %v1326 = vpack.c.b16 %v1319, %v1318
    %v1327 = vpack.c.b16 %v1321, %v1320
    %v1328 = vpack.c.b16 %v1323, %v1322
    %v1329 = vpack.c.b16 %v1325, %v1324
    %v1335 = vsel %vm196, %v1306, 0
    %v1338 = vsel %vm196, %v1307, 0
    %v1341 = vsel %vm196, %v1308, 0
    %v1344 = vsel %vm196, %v1309, 0
    %1346 = vmatpush.bf16.msra.mxu0 0
    %1347 = vmatpush.bf16.msra.mxu0 0
    %1348 = vmatpush.bf16.msra.mxu0 0
    %1349 = vmatpush.bf16.msra.mxu0 0
    %1350 = vmatpush.bf16.msra.mxu0 %v1329
    %1351 = vmatpush.bf16.msra.mxu0 %v1328
    %1352 = vmatpush.bf16.msra.mxu0 %v1327
    %1353 = vmatpush.bf16.msra.mxu0 %v1326
    %1354 = vmatmul.bf16.gmra.mxu0 %v1335
    %v1355 = vpop.f32.mrf.mxu0
    %v1356 = vadd.f32 0.0, %v1355
    %v1357 = vpop.f32.mrf.mxu0
    %v1358 = vadd.f32 0.0, %v1357
    %1359 = vmatmul.bf16.gmra.mxu0 %v1338
    %v1360 = vpop.f32.mrf.mxu0
    %v1361 = vadd.f32 0.0, %v1360
    %v1362 = vpop.f32.mrf.mxu0
    %v1363 = vadd.f32 0.0, %v1362
    %1364 = vmatmul.bf16.gmra.mxu0 %v1341
    %v1365 = vpop.f32.mrf.mxu0
    %v1366 = vadd.f32 0.0, %v1365
    %v1367 = vpop.f32.mrf.mxu0
    %v1368 = vadd.f32 0.0, %v1367
    %1369 = vmatmul.bf16.gmra.mxu0 %v1344
    %v1370 = vpop.f32.mrf.mxu0
    %v1371 = vadd.f32 0.0, %v1370
    %v1372 = vpop.f32.mrf.mxu0
    %v1373 = vadd.f32 0.0, %v1372
    %1374 = vdwg.mxu0
    %v1375 = vadd.f32 %v1281, %v1356
    %v1376 = vadd.f32 %v1282, %v1358
    %v1377 = vadd.f32 %v1283, %v1361
    %v1378 = vadd.f32 %v1284, %v1363
    %v1379 = vadd.f32 %v1285, %v1366
    %v1380 = vadd.f32 %v1286, %v1368
    %v1381 = vadd.f32 %v1287, %v1371
    %v1382 = vadd.f32 %v1288, %v1373
    %v1383 = vld [vmem:[%s0 + $0x4] sm:$0xf]
    %v1384 = vld [vmem:[%s0 + $0x8] sm:$0xf]
    %v1385 = vld [vmem:[%s0 + $0xc] sm:$0x1]
    %v1386 = vld [vmem:[%s0 + $0x14] sm:$0xf]
    %v1387 = vld [vmem:[%s0 + $0x18] sm:$0xf]
    %v1388 = vld [vmem:[%s0 + $0x1c] sm:$0x1]
    %v1389 = vld [vmem:[%s0 + $0x24] sm:$0xf]
    %v1390 = vld [vmem:[%s0 + $0x28] sm:$0xf]
    %v1391 = vld [vmem:[%s0 + $0x2c] sm:$0x1]
    %v1392 = vld [vmem:[%s0 + $0x34] sm:$0xf]
    %v1393 = vld [vmem:[%s0 + $0x38] sm:$0xf]
    %v1394 = vld [vmem:[%s0 + $0x3c] sm:$0x1]
    %v1396 = vshrl.u32 %v1383, 16
    %v1398 = vrot.slane %v1396, 4
    %v1399 = vshll.u32 %v1383, 16
    %v1401 = vrot.slane %v1399, 5
    %v1402 = vor.u32 %v1398, %v1401
    %v1403 = vrot.slane %v1402, 4
    %v1405 = vshll.u32 %v1384, 16
    %v1407 = vrot.slane %v1405, 5
    %v1408 = vsel %vm54, %v1403, %v1407
    %v1409 = vshrl.u32 %v1384, 16
    %v1411 = vrot.slane %v1409, 4
    %v1412 = vor.u32 %v1411, %v1407
    %v1413 = vrot.slane %v1412, 4
    %v1415 = vshll.u32 %v1385, 16
    %v1417 = vrot.slane %v1415, 5
    %v1418 = vsel %vm54, %v1413, %v1417
    %v1420 = vshrl.u32 %v1386, 16
    %v1422 = vrot.slane %v1420, 4
    %v1423 = vshll.u32 %v1386, 16
    %v1425 = vrot.slane %v1423, 5
    %v1426 = vor.u32 %v1422, %v1425
    %v1427 = vrot.slane %v1426, 4
    %v1429 = vshll.u32 %v1387, 16
    %v1431 = vrot.slane %v1429, 5
    %v1432 = vsel %vm54, %v1427, %v1431
    %v1433 = vshrl.u32 %v1387, 16
    %v1435 = vrot.slane %v1433, 4
    %v1436 = vor.u32 %v1435, %v1431
    %v1437 = vrot.slane %v1436, 4
    %v1439 = vshll.u32 %v1388, 16
    %v1441 = vrot.slane %v1439, 5
    %v1442 = vsel %vm54, %v1437, %v1441
    %v1444 = vshrl.u32 %v1389, 16
    %v1446 = vrot.slane %v1444, 4
    %v1447 = vshll.u32 %v1389, 16
    %v1449 = vrot.slane %v1447, 5
    %v1450 = vor.u32 %v1446, %v1449
    %v1451 = vrot.slane %v1450, 4
    %v1453 = vshll.u32 %v1390, 16
    %v1455 = vrot.slane %v1453, 5
    %v1456 = vsel %vm54, %v1451, %v1455
    %v1457 = vshrl.u32 %v1390, 16
    %v1459 = vrot.slane %v1457, 4
    %v1460 = vor.u32 %v1459, %v1455
    %v1461 = vrot.slane %v1460, 4
    %v1463 = vshll.u32 %v1391, 16
    %v1465 = vrot.slane %v1463, 5
    %v1466 = vsel %vm54, %v1461, %v1465
    %v1468 = vshrl.u32 %v1392, 16
    %v1470 = vrot.slane %v1468, 4
    %v1471 = vshll.u32 %v1392, 16
    %v1473 = vrot.slane %v1471, 5
    %v1474 = vor.u32 %v1470, %v1473
    %v1475 = vrot.slane %v1474, 4
    %v1477 = vshll.u32 %v1393, 16
    %v1479 = vrot.slane %v1477, 5
    %v1480 = vsel %vm54, %v1475, %v1479
    %v1481 = vshrl.u32 %v1393, 16
    %v1483 = vrot.slane %v1481, 4
    %v1484 = vor.u32 %v1483, %v1479
    %v1485 = vrot.slane %v1484, 4
    %v1487 = vshll.u32 %v1394, 16
    %v1489 = vrot.slane %v1487, 5
    %v1490 = vsel %vm54, %v1485, %v1489
    %s1491 = scalar_lea.vmem [#allocation2], 288
    %v1492 = vld [vmem:[%s1491] sm:$0xf]
    %v1493 = vld [vmem:[%s1491 + $0x4] sm:$0xf]
    %v1494 = vld [vmem:[%s1491 + $0x8] sm:$0xf]
    %v1495 = vld [vmem:[%s1491 + $0xc] sm:$0xf]
    %v1496 = vld [vmem:[%s1491 + $0x10] sm:$0xf]
    %v1497 = vld [vmem:[%s1491 + $0x14] sm:$0xf]
    %v1498 = vld [vmem:[%s1491 + $0x18] sm:$0xf]
    %v1499 = vld [vmem:[%s1491 + $0x1c] sm:$0xf]
    %v1500 = vunpack.c.l.b16 %v1408
    %v1501 = vunpack.c.l.b16 %v1418
    %v1502 = vunpack.c.l.b16 %v1432
    %v1503 = vunpack.c.l.b16 %v1442
    %v1504 = vunpack.c.l.b16 %v1456
    %v1505 = vunpack.c.l.b16 %v1466
    %v1506 = vunpack.c.l.b16 %v1480
    %v1507 = vunpack.c.l.b16 %v1490
    %v1508 = vpack.c.b16 %v1501, %v1500
    %v1509 = vpack.c.b16 %v1503, %v1502
    %v1510 = vpack.c.b16 %v1505, %v1504
    %v1511 = vpack.c.b16 %v1507, %v1506
    %v1520 = vunpack.c.l.b16 %v1492
    %v1521 = vunpack.c.l.b16 %v1493
    %v1522 = vunpack.c.l.b16 %v1494
    %v1523 = vunpack.c.l.b16 %v1495
    %v1524 = vunpack.c.l.b16 %v1496
    %v1525 = vunpack.c.l.b16 %v1497
    %v1526 = vunpack.c.l.b16 %v1498
    %v1527 = vunpack.c.l.b16 %v1499
    %v1528 = vpack.c.b16 %v1521, %v1520
    %v1529 = vpack.c.b16 %v1523, %v1522
    %v1530 = vpack.c.b16 %v1525, %v1524
    %v1531 = vpack.c.b16 %v1527, %v1526
    %v1537 = vsel %vm196, %v1508, 0
    %v1540 = vsel %vm196, %v1509, 0
    %v1543 = vsel %vm196, %v1510, 0
    %v1546 = vsel %vm196, %v1511, 0
    %1548 = vmatpush.bf16.msra.mxu0 0
    %1549 = vmatpush.bf16.msra.mxu0 0
    %1550 = vmatpush.bf16.msra.mxu0 0
    %1551 = vmatpush.bf16.msra.mxu0 0
    %1552 = vmatpush.bf16.msra.mxu0 %v1531
    %1553 = vmatpush.bf16.msra.mxu0 %v1530
    %1554 = vmatpush.bf16.msra.mxu0 %v1529
    %1555 = vmatpush.bf16.msra.mxu0 %v1528
    %1556 = vmatmul.bf16.gmra.mxu0 %v1537
    %v1557 = vpop.f32.mrf.mxu0
    %v1558 = vadd.f32 0.0, %v1557
    %v1559 = vpop.f32.mrf.mxu0
    %v1560 = vadd.f32 0.0, %v1559
    %1561 = vmatmul.bf16.gmra.mxu0 %v1540
    %v1562 = vpop.f32.mrf.mxu0
    %v1563 = vadd.f32 0.0, %v1562
    %v1564 = vpop.f32.mrf.mxu0
    %v1565 = vadd.f32 0.0, %v1564
    %1566 = vmatmul.bf16.gmra.mxu0 %v1543
    %v1567 = vpop.f32.mrf.mxu0
    %v1568 = vadd.f32 0.0, %v1567
    %v1569 = vpop.f32.mrf.mxu0
    %v1570 = vadd.f32 0.0, %v1569
    %1571 = vmatmul.bf16.gmra.mxu0 %v1546
    %v1572 = vpop.f32.mrf.mxu0
    %v1573 = vadd.f32 0.0, %v1572
    %v1574 = vpop.f32.mrf.mxu0
    %v1575 = vadd.f32 0.0, %v1574
    %1576 = vdwg.mxu0
    %v1577 = vadd.f32 %v1375, %v1558
    %v1578 = vadd.f32 %v1376, %v1560
    %v1579 = vadd.f32 %v1377, %v1563
    %v1580 = vadd.f32 %v1378, %v1565
    %v1581 = vadd.f32 %v1379, %v1568
    %v1582 = vadd.f32 %v1380, %v1570
    %v1583 = vadd.f32 %v1381, %v1573
    %v1584 = vadd.f32 %v1382, %v1575
    %v1585 = vld [vmem:[%s0 + $0x4] sm:$0xe]
    %v1586 = vld [vmem:[%s0 + $0x14] sm:$0xe]
    %v1587 = vld [vmem:[%s0 + $0x24] sm:$0xe]
    %v1588 = vld [vmem:[%s0 + $0x34] sm:$0xe]
    %v1601 = vrot.slane %v1585, 5
    %v1602 = vrot.slane %v1601, 4
    %v1603 = vrot.slane %v1384, 5
    %v1604 = vsel %vm337, %v1602, %v1603
    %v1605 = vrot.slane %v1603, 4
    %v1606 = vrot.slane %v1385, 5
    %v1607 = vsel %vm337, %v1605, %v1606
    %v1608 = vrot.slane %v1586, 5
    %v1609 = vrot.slane %v1608, 4
    %v1610 = vrot.slane %v1387, 5
    %v1611 = vsel %vm337, %v1609, %v1610
    %v1612 = vrot.slane %v1610, 4
    %v1613 = vrot.slane %v1388, 5
    %v1614 = vsel %vm337, %v1612, %v1613
    %v1615 = vrot.slane %v1587, 5
    %v1616 = vrot.slane %v1615, 4
    %v1617 = vrot.slane %v1390, 5
    %v1618 = vsel %vm337, %v1616, %v1617
    %v1619 = vrot.slane %v1617, 4
    %v1620 = vrot.slane %v1391, 5
    %v1621 = vsel %vm337, %v1619, %v1620
    %v1622 = vrot.slane %v1588, 5
    %v1623 = vrot.slane %v1622, 4
    %v1624 = vrot.slane %v1393, 5
    %v1625 = vsel %vm337, %v1623, %v1624
    %v1626 = vrot.slane %v1624, 4
    %v1627 = vrot.slane %v1394, 5
    %v1628 = vsel %vm337, %v1626, %v1627
    %s1629 = scalar_lea.vmem [#allocation2], 320
    %v1630 = vld [vmem:[%s1629] sm:$0xf]
    %v1631 = vld [vmem:[%s1629 + $0x4] sm:$0xf]
    %v1632 = vld [vmem:[%s1629 + $0x8] sm:$0xf]
    %v1633 = vld [vmem:[%s1629 + $0xc] sm:$0xf]
    %v1634 = vld [vmem:[%s1629 + $0x10] sm:$0xf]
    %v1635 = vld [vmem:[%s1629 + $0x14] sm:$0xf]
    %v1636 = vld [vmem:[%s1629 + $0x18] sm:$0xf]
    %v1637 = vld [vmem:[%s1629 + $0x1c] sm:$0xf]
    %v1638 = vunpack.c.l.b16 %v1604
    %v1639 = vunpack.c.l.b16 %v1607
    %v1640 = vunpack.c.l.b16 %v1611
    %v1641 = vunpack.c.l.b16 %v1614
    %v1642 = vunpack.c.l.b16 %v1618
    %v1643 = vunpack.c.l.b16 %v1621
    %v1644 = vunpack.c.l.b16 %v1625
    %v1645 = vunpack.c.l.b16 %v1628
    %v1646 = vpack.c.b16 %v1639, %v1638
    %v1647 = vpack.c.b16 %v1641, %v1640
    %v1648 = vpack.c.b16 %v1643, %v1642
    %v1649 = vpack.c.b16 %v1645, %v1644
    %v1658 = vunpack.c.l.b16 %v1630
    %v1659 = vunpack.c.l.b16 %v1631
    %v1660 = vunpack.c.l.b16 %v1632
    %v1661 = vunpack.c.l.b16 %v1633
    %v1662 = vunpack.c.l.b16 %v1634
    %v1663 = vunpack.c.l.b16 %v1635
    %v1664 = vunpack.c.l.b16 %v1636
    %v1665 = vunpack.c.l.b16 %v1637
    %v1666 = vpack.c.b16 %v1659, %v1658
    %v1667 = vpack.c.b16 %v1661, %v1660
    %v1668 = vpack.c.b16 %v1663, %v1662
    %v1669 = vpack.c.b16 %v1665, %v1664
    %v1675 = vsel %vm196, %v1646, 0
    %v1678 = vsel %vm196, %v1647, 0
    %v1681 = vsel %vm196, %v1648, 0
    %v1684 = vsel %vm196, %v1649, 0
    %1686 = vmatpush.bf16.msra.mxu0 0
    %1687 = vmatpush.bf16.msra.mxu0 0
    %1688 = vmatpush.bf16.msra.mxu0 0
    %1689 = vmatpush.bf16.msra.mxu0 0
    %1690 = vmatpush.bf16.msra.mxu0 %v1669
    %1691 = vmatpush.bf16.msra.mxu0 %v1668
    %1692 = vmatpush.bf16.msra.mxu0 %v1667
    %1693 = vmatpush.bf16.msra.mxu0 %v1666
    %1694 = vmatmul.bf16.gmra.mxu0 %v1675
    %v1695 = vpop.f32.mrf.mxu0
    %v1696 = vadd.f32 0.0, %v1695
    %v1697 = vpop.f32.mrf.mxu0
    %v1698 = vadd.f32 0.0, %v1697
    %1699 = vmatmul.bf16.gmra.mxu0 %v1678
    %v1700 = vpop.f32.mrf.mxu0
    %v1701 = vadd.f32 0.0, %v1700
    %v1702 = vpop.f32.mrf.mxu0
    %v1703 = vadd.f32 0.0, %v1702
    %1704 = vmatmul.bf16.gmra.mxu0 %v1681
    %v1705 = vpop.f32.mrf.mxu0
    %v1706 = vadd.f32 0.0, %v1705
    %v1707 = vpop.f32.mrf.mxu0
    %v1708 = vadd.f32 0.0, %v1707
    %1709 = vmatmul.bf16.gmra.mxu0 %v1684
    %v1710 = vpop.f32.mrf.mxu0
    %v1711 = vadd.f32 0.0, %v1710
    %v1712 = vpop.f32.mrf.mxu0
    %v1713 = vadd.f32 0.0, %v1712
    %1714 = vdwg.mxu0
    %v1715 = vadd.f32 %v1577, %v1696
    %v1716 = vadd.f32 %v1578, %v1698
    %v1717 = vadd.f32 %v1579, %v1701
    %v1718 = vadd.f32 %v1580, %v1703
    %v1719 = vadd.f32 %v1581, %v1706
    %v1720 = vadd.f32 %v1582, %v1708
    %v1721 = vadd.f32 %v1583, %v1711
    %v1722 = vadd.f32 %v1584, %v1713
    %v1723 = vld [vmem:[%s2] sm:$0x1]
    %v1725 = vperm.slane %v1723, 0
    %v1727 = vadd.f32 %v1715, %v1725
    %v1728 = vadd.f32 %v1716, %v1725
    %v1729 = vadd.f32 %v1717, %v1725
    %v1730 = vadd.f32 %v1718, %v1725
    %v1731 = vadd.f32 %v1719, %v1725
    %v1732 = vadd.f32 %v1720, %v1725
    %v1733 = vadd.f32 %v1721, %v1725
    %v1734 = vadd.f32 %v1722, %v1725
    %vm1735 = vcmp.ge.f32.partialorder %v1727, 0.0
    %vm1736 = vcmp.ge.f32.partialorder %v1728, 0.0
    %vm1737 = vcmp.ge.f32.partialorder %v1729, 0.0
    %vm1738 = vcmp.ge.f32.partialorder %v1730, 0.0
    %vm1739 = vcmp.ge.f32.partialorder %v1731, 0.0
    %vm1740 = vcmp.ge.f32.partialorder %v1732, 0.0
    %vm1741 = vcmp.ge.f32.partialorder %v1733, 0.0
    %vm1742 = vcmp.ge.f32.partialorder %v1734, 0.0
    %v1743 = vmul.f32 %v1727, 0.2
    %v1744 = vmul.f32 %v1728, 0.2
    %v1745 = vmul.f32 %v1729, 0.2
    %v1746 = vmul.f32 %v1730, 0.2
    %v1747 = vmul.f32 %v1731, 0.2
    %v1748 = vmul.f32 %v1732, 0.2
    %v1749 = vmul.f32 %v1733, 0.2
    %v1750 = vmul.f32 %v1734, 0.2
    %v1751 = vsel %vm1735, %v1727, %v1743
    %v1752 = vsel %vm1736, %v1728, %v1744
    %v1753 = vsel %vm1737, %v1729, %v1745
    %v1754 = vsel %vm1738, %v1730, %v1746
    %v1755 = vsel %vm1739, %v1731, %v1747
    %v1756 = vsel %vm1740, %v1732, %v1748
    %v1757 = vsel %vm1741, %v1733, %v1749
    %v1758 = vsel %vm1742, %v1734, %v1750
    %v1759 = vpack.c.bf16 %v1751, %v1751
    %v1760 = vpack.c.bf16 %v1752, %v1752
    %v1761 = vpack.c.bf16 %v1753, %v1753
    %v1762 = vpack.c.bf16 %v1754, %v1754
    %v1763 = vpack.c.bf16 %v1755, %v1755
    %v1764 = vpack.c.bf16 %v1756, %v1756
    %v1765 = vpack.c.bf16 %v1757, %v1757
    %v1766 = vpack.c.bf16 %v1758, %v1758
    %vm1767 = vcmask 519168
    %1768 = vst.msk [vmem:[#allocation5] sm:$0xf] %vm1767, %v1759
    %1769 = vst.msk [vmem:[#allocation5 + $0x4] sm:$0xf] %vm1767, %v1760
    %1770 = vst.msk [vmem:[#allocation5 + $0x8] sm:$0xf] %vm1767, %v1761
    %1771 = vst.msk [vmem:[#allocation5 + $0xc] sm:$0xf] %vm1767, %v1762
    %1772 = vst.msk [vmem:[#allocation5 + $0x10] sm:$0xf] %vm1767, %v1763
    %1773 = vst.msk [vmem:[#allocation5 + $0x14] sm:$0xf] %vm1767, %v1764
    %1774 = vst.msk [vmem:[#allocation5 + $0x18] sm:$0xf] %vm1767, %v1765
    %1775 = vst.msk [vmem:[#allocation5 + $0x1c] sm:$0xf] %vm1767, %v1766
    // Predicated region
    $region18: #{tpu_custom_call.1} parent=1 // pred_check
      _
    $region19: #{tpu_custom_call.1} parent=1 // pred_check_branch
      %1777 = sbr.rel (0) target = $region21
    $region20: #{tpu_custom_call.1} parent=1 // pred_region
      %1779 = vsyncadd [#allocation4], 0
      %s1780 = sshll.u32 [#allocation5], 4
      %s1781 = int_to_ptr.vmem [resolvable:$true] %s1780
      %s1782 = sshll.u32 %s3, 4
      %s1783 = int_to_ptr.hbm [resolvable:$true] %s1782
      %1788 = dma.vmem_to_hbm [thread:$0]  %s1781, 512, %s1783, [#allocation4], 64, 64, 4
    $region21: #{tpu_custom_call.1} parent=1 // pred_fallthru
      _
    // Predicated region
    $region22: #{tpu_custom_call.1} parent=1 // pred_check
      _
    $region23: #{tpu_custom_call.1} parent=1 // pred_check_branch
      %1790 = sbr.rel (0) target = $region25
    $region24: #{tpu_custom_call.1} parent=1 // pred_region
      %1792 = dma.done [#allocation4], 512
    $region25: #{tpu_custom_call.1} parent=1 // pred_fallthru
      _
    %1793 = vsyncpa [#allocation3], 1
    %1794 = vsyncpa [#allocation4], 1

</llo_original>
